<compile_context>
chip_gen: v5e
topology: v5e:2x2
jax: 0.10.0
libtpu: 0.0.40
codegen_flags: <defaults>
</compile_context>

<pallas_src>
import jax
import jax.numpy as jnp
from jax.experimental import pallas as pl
from jax.experimental.pallas import tpu as pltpu

LANES = 128          # lane-dense feature padding
MAX_TILE_M = 2048    # rows per grid step (fits v5e's 16 MiB scoped-VMEM default)


# ---------------------------------------------------------------------------
# Pallas kernels
# ---------------------------------------------------------------------------
def _conv_pool_kernel(p_ref, w_ref, b_ref, o_ref):
    """Fused conv (one matmul) + 2x2 maxpool + bias + ReLU.

    p_ref: (tm, K) bf16   shared 6x6-tap patches, K = 36 * C_in
    w_ref: (K, 512) bf16  packed weights; 128-lane group t = pool offset t
    b_ref: (1, 128) f32
    o_ref: (tm, 128) bf16
    maxpool(relu(conv + b)) == relu(max_t(conv_t) + b) (bias const, relu monotone).
    """
    acc = jnp.dot(p_ref[...], w_ref[...], preferred_element_type=jnp.float32)
    m = jnp.maximum(jnp.maximum(acc[:, 0:LANES], acc[:, LANES:2 * LANES]),
                    jnp.maximum(acc[:, 2 * LANES:3 * LANES],
                                acc[:, 3 * LANES:4 * LANES]))
    o_ref[...] = jnp.maximum(m + b_ref[...], 0.0).astype(o_ref.dtype)


def _fc_stack_kernel(x_ref, w1_ref, b1_ref, w2_ref, b2_ref, w3_ref, b3_ref, o_ref):
    """Fused fc1+ReLU, fc2+ReLU, fc3. Weight/feature dims padded to 128 lanes."""
    h1 = jnp.dot(x_ref[...], w1_ref[...], preferred_element_type=jnp.float32)
    h1 = jnp.maximum(h1 + b1_ref[...], 0.0)
    h2 = jnp.dot(h1.astype(jnp.bfloat16), w2_ref[...],
                 preferred_element_type=jnp.float32)
    h2 = jnp.maximum(h2 + b2_ref[...], 0.0)
    o = jnp.dot(h2.astype(jnp.bfloat16), w3_ref[...],
                preferred_element_type=jnp.float32)
    o_ref[...] = (o + b3_ref[...]).astype(o_ref.dtype)


# ---------------------------------------------------------------------------
# Kernel wrappers
# ---------------------------------------------------------------------------
def _tile_rows(m, max_tile=MAX_TILE_M):
    """Row tile: <= max_tile, multiple of 8, and >=2 grid steps when m > 8 so
    that ("parallel",) grid axes shard across both v7x TensorCores."""
    if m <= 8:
        return m
    tm = min(max_tile, -(-m // 2))      # ceil(m / 2), capped
    return -(-tm // 8) * 8              # round up to sublane multiple


def conv_pool(p, w, b):
    """p: (M, K) bf16 patches; w: (K, 512) bf16; b: (1, 128) f32 -> (M, 128) bf16."""
    M, K = p.shape
    tm = _tile_rows(M)
    return pl.pallas_call(
        _conv_pool_kernel,
        out_shape=jax.ShapeDtypeStruct((M, LANES), jnp.bfloat16),
        grid_spec=pltpu.PrefetchScalarGridSpec(
            num_scalar_prefetch=0,
            grid=(pl.cdiv(M, tm),),
            in_specs=[
                pl.BlockSpec((tm, K), lambda i: (i, 0)),
                pl.BlockSpec((K, 4 * LANES), lambda i: (0, 0)),
                pl.BlockSpec((1, LANES), lambda i: (0, 0)),
            ],
            out_specs=pl.BlockSpec((tm, LANES), lambda i: (i, 0)),
        ),
        compiler_params=pltpu.CompilerParams(
            dimension_semantics=("parallel",)),
    )(p, w, b)


def fc_stack(x, pp):
    """x: (N, 400) bf16 -> (N, 128) f32 (valid logits in cols 0..9)."""
    N, K1 = x.shape
    tm = _tile_rows(N)
    return pl.pallas_call(
        _fc_stack_kernel,
        out_shape=jax.ShapeDtypeStruct((N, LANES), jnp.float32),
        grid_spec=pltpu.PrefetchScalarGridSpec(
            num_scalar_prefetch=0,
            grid=(pl.cdiv(N, tm),),
            in_specs=[
                pl.BlockSpec((tm, K1), lambda i: (i, 0)),
                pl.BlockSpec((K1, LANES), lambda i: (0, 0)),
                pl.BlockSpec((1, LANES), lambda i: (0, 0)),
                pl.BlockSpec((LANES, LANES), lambda i: (0, 0)),
                pl.BlockSpec((1, LANES), lambda i: (0, 0)),
                pl.BlockSpec((LANES, LANES), lambda i: (0, 0)),
                pl.BlockSpec((1, LANES), lambda i: (0, 0)),
            ],
            out_specs=pl.BlockSpec((tm, LANES), lambda i: (i, 0)),
        ),
        compiler_params=pltpu.CompilerParams(
            dimension_semantics=("parallel",)),
    )(x, pp["fc1_w"], pp["fc1_b"], pp["fc2_w"], pp["fc2_b"],
      pp["fc3_w"], pp["fc3_b"])


# ---------------------------------------------------------------------------
# Glue: shared 6x6-tap pooled im2col slab (XLA ops, layout only, bf16)
# ---------------------------------------------------------------------------
def _pool_patches(x_nhwc, k):
    """P[(n,i,j), (r,s,c)] = x[n, 2i+r, 2j+s, c], r,s in [0, k+1).

    One slab shared by all four 2x2-pool offsets (the offset is folded into
    the packed conv weight), ~2.8x fewer bytes than four 25-tap slabs.
    """
    N, H, W, C = x_nhwc.shape
    OH, OW = H - k + 1, W - k + 1
    assert OH % 2 == 0 and OW % 2 == 0, (OH, OW)   # 2x2 maxpool must tile exactly
    OHP, OWP = OH // 2, OW // 2
    R = k + 1
    cols = [x_nhwc[:, r:r + 2 * OHP - 1:2, s:s + 2 * OWP - 1:2, :]
            for r in range(R) for s in range(R)]
    p = jnp.concatenate(cols, axis=-1)             # (N, OHP, OWP, R*R*C)
    return p.reshape(N * OHP * OWP, R * R * C), (N, OHP, OWP)


# ---------------------------------------------------------------------------
# Params: PyTorch-layout init + one-time packing into kernel-friendly layout
# ---------------------------------------------------------------------------
def init_params(key):
    def uniform(key, shape, fan_in):
        bound = 1.0 / jnp.sqrt(jnp.float32(fan_in))
        return jax.random.uniform(key, shape, jnp.float32, -bound, bound)

    ks = jax.random.split(key, 10)
    return {
        "conv1_w": uniform(ks[0], (6, 1, 5, 5), 1 * 5 * 5),
        "conv1_b": uniform(ks[1], (6,), 1 * 5 * 5),
        "conv2_w": uniform(ks[2], (16, 6, 5, 5), 6 * 5 * 5),
        "conv2_b": uniform(ks[3], (16,), 6 * 5 * 5),
        # Linear weights stored as (in, out) == transpose of PyTorch (out, in),
        # with input-feature order matching PyTorch's (c, h, w) flatten.
        "fc1_w": uniform(ks[4], (16 * 5 * 5, 120), 16 * 5 * 5),
        "fc1_b": uniform(ks[5], (120,), 16 * 5 * 5),
        "fc2_w": uniform(ks[6], (120, 84), 120),
        "fc2_b": uniform(ks[7], (84,), 120),
        "fc3_w": uniform(ks[8], (84, 10), 84),
        "fc3_b": uniform(ks[9], (10,), 84),
    }


def _pack_conv(w_oihw, bias):
    """Pack OIHW conv weight into (R*R*ic, 4*128) bf16: column group t=(ph,pw)
    holds W[(r,s,c), oc] = w[oc, c, r-ph, s-pw] (zero outside the 5x5 window),
    so one matmul on the shared 6x6-tap slab yields all four pool offsets."""
    oc, ic, kh, kw = w_oihw.shape
    R = kh + 1
    w = jnp.transpose(w_oihw, (2, 3, 1, 0))                 # (kh, kw, ic, oc)
    blocks = []
    for ph in range(2):
        for pw in range(2):
            wb = jnp.zeros((R, R, ic, LANES), jnp.float32)
            wb = wb.at[ph:ph + kh, pw:pw + kw, :, :oc].set(w)
            blocks.append(wb.reshape(R * R * ic, LANES))
    w_packed = jnp.concatenate(blocks, axis=-1).astype(jnp.bfloat16)  # (R*R*ic, 512)
    b = jnp.pad(bias, (0, LANES - oc)).reshape(1, LANES).astype(jnp.float32)
    return w_packed, b


def pack_params(params):
    """One-time layout packing: bf16 weights, 128-lane output padding, pool
    offsets folded into conv weights, NCHW-flatten permutation folded into fc1."""
    c1_w, c1_b = _pack_conv(params["conv1_w"], params["conv1_b"])
    c2_w, c2_b = _pack_conv(params["conv2_w"], params["conv2_b"])

    # fc1: kernel feeds features in (h, w, c16) order (only the 16 valid conv2
    # channels -> K=400); params are stored with PyTorch's (c, h, w) order.
    w1 = params["fc1_w"].reshape(16, 25, 120)               # (c, hw, out)
    w1 = jnp.transpose(w1, (1, 0, 2)).reshape(400, 120)     # (hw*c, out)
    w1 = jnp.pad(w1, ((0, 0), (0, LANES - 120))).astype(jnp.bfloat16)
    b1 = jnp.pad(params["fc1_b"], (0, LANES - 120)).reshape(1, LANES).astype(jnp.float32)

    w2 = jnp.pad(params["fc2_w"], ((0, LANES - 120), (0, LANES - 84))).astype(jnp.bfloat16)
    b2 = jnp.pad(params["fc2_b"], (0, LANES - 84)).reshape(1, LANES).astype(jnp.float32)
    w3 = jnp.pad(params["fc3_w"], ((0, LANES - 84), (0, LANES - 10))).astype(jnp.bfloat16)
    b3 = jnp.pad(params["fc3_b"], (0, LANES - 10)).reshape(1, LANES).astype(jnp.float32)

    return {"c1_w": c1_w, "c1_b": c1_b, "c2_w": c2_w, "c2_b": c2_b,
            "fc1_w": w1, "fc1_b": b1, "fc2_w": w2, "fc2_b": b2,
            "fc3_w": w3, "fc3_b": b3}


# ---------------------------------------------------------------------------
# Net forward
# ---------------------------------------------------------------------------
def net_forward(x_nchw, pp):
    N = x_nchw.shape[0]
    # NHWC bf16 *before* any patch glue (halves the glue's HBM traffic).
    x = jnp.transpose(x_nchw, (0, 2, 3, 1)).astype(jnp.bfloat16)     # (N,32,32,1)

    # conv1 + bias + ReLU + 2x2 maxpool -> (N*14*14, 128) bf16, 6 valid channels
    p1, (_, ohp1, owp1) = _pool_patches(x, 5)
    y = conv_pool(p1, pp["c1_w"], pp["c1_b"])
    y = y.reshape(N, ohp1, owp1, LANES)[..., :6]                     # (N,14,14,6)

    # conv2 + bias + ReLU + 2x2 maxpool -> (N*5*5, 128) bf16, 16 valid channels
    p2, (_, ohp2, owp2) = _pool_patches(y, 5)
    z = conv_pool(p2, pp["c2_w"], pp["c2_b"])

    # Slice to the 16 valid channels before flatten: fc1 K = 400 (not 3200).
    feats = z.reshape(N, ohp2, owp2, LANES)[..., :16].reshape(N, ohp2 * owp2 * 16)
    out = fc_stack(feats, pp)                                        # (N, 128) f32
    return out[:, :10]


# ---------------------------------------------------------------------------
# Pure-JAX reference (f32) for tolerance-based validation
# ---------------------------------------------------------------------------
def net_reference(x_nchw, params):
    x = jnp.transpose(x_nchw, (0, 2, 3, 1))                          # NHWC f32

    def conv(a, w_oihw, b):
        w = jnp.transpose(w_oihw, (2, 3, 1, 0))                      # HWIO
        y = jax.lax.conv_general_dilated(
            a, w, (1, 1), "VALID", dimension_numbers=("NHWC", "HWIO", "NHWC"))
        return y + b

    def pool(a):
        return jax.lax.reduce_window(a, -jnp.inf, jax.lax.max,
                                     (1, 2, 2, 1), (1, 2, 2, 1), "VALID")

    y = pool(jax.nn.relu(conv(x, params["conv1_w"], params["conv1_b"])))
    y = pool(jax.nn.relu(conv(y, params["conv2_w"], params["conv2_b"])))
    feats = jnp.transpose(y, (0, 3, 1, 2)).reshape(y.shape[0], -1)   # NCHW flatten
    h = jax.nn.relu(feats @ params["fc1_w"] + params["fc1_b"])
    h = jax.nn.relu(h @ params["fc2_w"] + params["fc2_b"])
    return h @ params["fc3_w"] + params["fc3_b"]


if __name__ == "__main__":
    key = jax.random.PRNGKey(0)
    k_x, k_p = jax.random.split(key)
    # LeNet geometry requires 32x32 input for the 16*5*5 flat features.
    x = jax.random.normal(k_x, (2, 1, 32, 32), jnp.float32)
    params = init_params(k_p)
    packed = pack_params(params)             # one-time weight layout packing

    out = jax.block_until_ready(jax.jit(net_forward)(x, packed))
    assert out.shape == (2, 10) and out.dtype == jnp.float32, (out.shape, out.dtype)

    # bf16 MXU path -> validate against the f32 reference with a tolerance.
    ref = jax.block_until_ready(jax.jit(net_reference)(x, params))
    assert jnp.allclose(out, ref, atol=2e-2, rtol=2e-2), \
        float(jnp.max(jnp.abs(out - ref)))
    print("KERNEL_OK")
</pallas_src>

<mosaic_0001>
module attributes {stable_mosaic.version = 11 : i64} {
  func.func @_conv_pool_kernel(%arg0: i32, %arg1: memref<200x36xbf16, #tpu.memory_space<vmem>>, %arg2: memref<36x512xbf16, #tpu.memory_space<vmem>>, %arg3: memref<1x128xf32, #tpu.memory_space<vmem>>, %arg4: memref<200x128xbf16, #tpu.memory_space<vmem>>) attributes {dimension_semantics = [#tpu.dimension_semantics<parallel>], iteration_bounds = array<i64: 2>, scalar_prefetch = 0 : i64, scratch_operands = 0 : i64, tpu.core_type = #tpu.core_type<tc>, window_params = [{transform_indices = @transform_0, window_bounds = array<i64: 200, 36>}, {pipeline_mode = #tpu.pipeline_mode<synchronous>, transform_indices = @transform_1, window_bounds = array<i64: 36, 512>}, {pipeline_mode = #tpu.pipeline_mode<synchronous>, transform_indices = @transform_2, window_bounds = array<i64: 1, 128>}, {transform_indices = @transform_3, window_bounds = array<i64: 200, 128>}]} {
    %c0 = arith.constant 0 : index
    %c0_0 = arith.constant 0 : index
    %0 = vector.load %arg1[%c0, %c0_0] : memref<200x36xbf16, #tpu.memory_space<vmem>>, vector<200x36xbf16>
    %c0_1 = arith.constant 0 : index
    %c0_2 = arith.constant 0 : index
    %1 = vector.load %arg2[%c0_1, %c0_2] : memref<36x512xbf16, #tpu.memory_space<vmem>>, vector<36x512xbf16>
    %cst = arith.constant dense<0.000000e+00> : vector<200x512xf32>
    %2 = tpu.matmul %0, %1, %cst {dimension_numbers = #tpu.dot_dimension_numbers<[1], [0], [0], [1], [0, 0, 1, 1], [], []>} : vector<200x36xbf16>, vector<36x512xbf16>, vector<200x512xf32> -> vector<200x512xf32>
    %3 = vector.extract_strided_slice %2 {offsets = [0, 0], sizes = [200, 128], strides = [1, 1]} : vector<200x512xf32> to vector<200x128xf32>
    %4 = vector.extract_strided_slice %2 {offsets = [0, 128], sizes = [200, 128], strides = [1, 1]} : vector<200x512xf32> to vector<200x128xf32>
    %5 = arith.maximumf %3, %4 : vector<200x128xf32>
    %6 = vector.extract_strided_slice %2 {offsets = [0, 256], sizes = [200, 128], strides = [1, 1]} : vector<200x512xf32> to vector<200x128xf32>
    %7 = vector.extract_strided_slice %2 {offsets = [0, 384], sizes = [200, 128], strides = [1, 1]} : vector<200x512xf32> to vector<200x128xf32>
    %8 = arith.maximumf %6, %7 : vector<200x128xf32>
    %9 = arith.maximumf %5, %8 : vector<200x128xf32>
    %c0_3 = arith.constant 0 : index
    %c0_4 = arith.constant 0 : index
    %10 = vector.load %arg3[%c0_3, %c0_4] : memref<1x128xf32, #tpu.memory_space<vmem>>, vector<1x128xf32>
    %11 = vector.broadcast %10 : vector<1x128xf32> to vector<200x128xf32>
    %12 = arith.addf %9, %11 : vector<200x128xf32>
    %cst_5 = arith.constant 0.000000e+00 : f32
    %13 = vector.broadcast %cst_5 : f32 to vector<200x128xf32>
    %14 = arith.maximumf %12, %13 : vector<200x128xf32>
    %15 = arith.truncf %14 : vector<200x128xf32> to vector<200x128xbf16>
    %c0_6 = arith.constant 0 : index
    %c0_7 = arith.constant 0 : index
    %16 = vector.load %arg4[%c0_6, %c0_7] : memref<200x128xbf16, #tpu.memory_space<vmem>>, vector<200x128xbf16>
    tpu.vector_store %arg4[%c0_6, %c0_7], %15 {strides = array<i32>} : memref<200x128xbf16, #tpu.memory_space<vmem>>, vector<200x128xbf16>,
    return
  }
  func.func @transform_0(%arg0: i32) -> (i32, i32) {
    %c0_i32 = arith.constant 0 : i32
    %c0_i32_0 = arith.constant 0 : i32
    return %arg0, %c0_i32 : i32, i32
  }
  func.func @transform_1(%arg0: i32) -> (i32, i32) {
    %c0_i32 = arith.constant 0 : i32
    %c0_i32_0 = arith.constant 0 : i32
    %c0_i32_1 = arith.constant 0 : i32
    return %c0_i32, %c0_i32_0 : i32, i32
  }
  func.func @transform_2(%arg0: i32) -> (i32, i32) {
    %c0_i32 = arith.constant 0 : i32
    %c0_i32_0 = arith.constant 0 : i32
    %c0_i32_1 = arith.constant 0 : i32
    return %c0_i32, %c0_i32_0 : i32, i32
  }
  func.func @transform_3(%arg0: i32) -> (i32, i32) {
    %c0_i32 = arith.constant 0 : i32
    %c0_i32_0 = arith.constant 0 : i32
    return %arg0, %c0_i32 : i32, i32
  }
}

module attributes {stable_mosaic.version = 11 : i64} {
  func.func @_conv_pool_kernel(%arg0: i32, %arg1: memref<32x216xbf16, #tpu.memory_space<vmem>>, %arg2: memref<216x512xbf16, #tpu.memory_space<vmem>>, %arg3: memref<1x128xf32, #tpu.memory_space<vmem>>, %arg4: memref<32x128xbf16, #tpu.memory_space<vmem>>) attributes {dimension_semantics = [#tpu.dimension_semantics<parallel>], iteration_bounds = array<i64: 2>, scalar_prefetch = 0 : i64, scratch_operands = 0 : i64, tpu.core_type = #tpu.core_type<tc>, window_params = [{transform_indices = @transform_0, window_bounds = array<i64: 32, 216>}, {pipeline_mode = #tpu.pipeline_mode<synchronous>, transform_indices = @transform_1, window_bounds = array<i64: 216, 512>}, {pipeline_mode = #tpu.pipeline_mode<synchronous>, transform_indices = @transform_2, window_bounds = array<i64: 1, 128>}, {transform_indices = @transform_3, window_bounds = array<i64: 32, 128>}]} {
    %c0 = arith.constant 0 : index
    %c0_0 = arith.constant 0 : index
    %0 = vector.load %arg1[%c0, %c0_0] : memref<32x216xbf16, #tpu.memory_space<vmem>>, vector<32x216xbf16>
    %c0_1 = arith.constant 0 : index
    %c0_2 = arith.constant 0 : index
    %1 = vector.load %arg2[%c0_1, %c0_2] : memref<216x512xbf16, #tpu.memory_space<vmem>>, vector<216x512xbf16>
    %cst = arith.constant dense<0.000000e+00> : vector<32x512xf32>
    %2 = tpu.matmul %0, %1, %cst {dimension_numbers = #tpu.dot_dimension_numbers<[1], [0], [0], [1], [0, 0, 1, 1], [], []>} : vector<32x216xbf16>, vector<216x512xbf16>, vector<32x512xf32> -> vector<32x512xf32>
    %3 = vector.extract_strided_slice %2 {offsets = [0, 0], sizes = [32, 128], strides = [1, 1]} : vector<32x512xf32> to vector<32x128xf32>
    %4 = vector.extract_strided_slice %2 {offsets = [0, 128], sizes = [32, 128], strides = [1, 1]} : vector<32x512xf32> to vector<32x128xf32>
    %5 = arith.maximumf %3, %4 : vector<32x128xf32>
    %6 = vector.extract_strided_slice %2 {offsets = [0, 256], sizes = [32, 128], strides = [1, 1]} : vector<32x512xf32> to vector<32x128xf32>
    %7 = vector.extract_strided_slice %2 {offsets = [0, 384], sizes = [32, 128], strides = [1, 1]} : vector<32x512xf32> to vector<32x128xf32>
    %8 = arith.maximumf %6, %7 : vector<32x128xf32>
    %9 = arith.maximumf %5, %8 : vector<32x128xf32>
    %c0_3 = arith.constant 0 : index
    %c0_4 = arith.constant 0 : index
    %10 = vector.load %arg3[%c0_3, %c0_4] : memref<1x128xf32, #tpu.memory_space<vmem>>, vector<1x128xf32>
    %11 = vector.broadcast %10 : vector<1x128xf32> to vector<32x128xf32>
    %12 = arith.addf %9, %11 : vector<32x128xf32>
    %cst_5 = arith.constant 0.000000e+00 : f32
    %13 = vector.broadcast %cst_5 : f32 to vector<32x128xf32>
    %14 = arith.maximumf %12, %13 : vector<32x128xf32>
    %15 = arith.truncf %14 : vector<32x128xf32> to vector<32x128xbf16>
    %c0_6 = arith.constant 0 : index
    %c0_7 = arith.constant 0 : index
    %16 = vector.load %arg4[%c0_6, %c0_7] : memref<32x128xbf16, #tpu.memory_space<vmem>>, vector<32x128xbf16>
    tpu.vector_store %arg4[%c0_6, %c0_7], %15 {strides = array<i32>} : memref<32x128xbf16, #tpu.memory_space<vmem>>, vector<32x128xbf16>,
    return
  }
  func.func @transform_0(%arg0: i32) -> (i32, i32) {
    %c0_i32 = arith.constant 0 : i32
    %c0_i32_0 = arith.constant 0 : i32
    return %arg0, %c0_i32 : i32, i32
  }
  func.func @transform_1(%arg0: i32) -> (i32, i32) {
    %c0_i32 = arith.constant 0 : i32
    %c0_i32_0 = arith.constant 0 : i32
    %c0_i32_1 = arith.constant 0 : i32
    return %c0_i32, %c0_i32_0 : i32, i32
  }
  func.func @transform_2(%arg0: i32) -> (i32, i32) {
    %c0_i32 = arith.constant 0 : i32
    %c0_i32_0 = arith.constant 0 : i32
    %c0_i32_1 = arith.constant 0 : i32
    return %c0_i32, %c0_i32_0 : i32, i32
  }
  func.func @transform_3(%arg0: i32) -> (i32, i32) {
    %c0_i32 = arith.constant 0 : i32
    %c0_i32_0 = arith.constant 0 : i32
    return %arg0, %c0_i32 : i32, i32
  }
}

module attributes {stable_mosaic.version = 11 : i64} {
  func.func @_fc_stack_kernel(%arg0: i32, %arg1: memref<2x400xbf16, #tpu.memory_space<vmem>>, %arg2: memref<400x128xbf16, #tpu.memory_space<vmem>>, %arg3: memref<1x128xf32, #tpu.memory_space<vmem>>, %arg4: memref<128x128xbf16, #tpu.memory_space<vmem>>, %arg5: memref<1x128xf32, #tpu.memory_space<vmem>>, %arg6: memref<128x128xbf16, #tpu.memory_space<vmem>>, %arg7: memref<1x128xf32, #tpu.memory_space<vmem>>, %arg8: memref<2x128xf32, #tpu.memory_space<vmem>>) attributes {dimension_semantics = [#tpu.dimension_semantics<parallel>], iteration_bounds = array<i64: 1>, scalar_prefetch = 0 : i64, scratch_operands = 0 : i64, tpu.core_type = #tpu.core_type<tc>, window_params = [{transform_indices = @transform_0, window_bounds = array<i64: 2, 400>}, {pipeline_mode = #tpu.pipeline_mode<synchronous>, transform_indices = @transform_1, window_bounds = array<i64: 400, 128>}, {pipeline_mode = #tpu.pipeline_mode<synchronous>, transform_indices = @transform_2, window_bounds = array<i64: 1, 128>}, {pipeline_mode = #tpu.pipeline_mode<synchronous>, transform_indices = @transform_3, window_bounds = array<i64: 128, 128>}, {pipeline_mode = #tpu.pipeline_mode<synchronous>, transform_indices = @transform_4, window_bounds = array<i64: 1, 128>}, {pipeline_mode = #tpu.pipeline_mode<synchronous>, transform_indices = @transform_5, window_bounds = array<i64: 128, 128>}, {pipeline_mode = #tpu.pipeline_mode<synchronous>, transform_indices = @transform_6, window_bounds = array<i64: 1, 128>}, {transform_indices = @transform_7, window_bounds = array<i64: 2, 128>}]} {
    %c0 = arith.constant 0 : index
    %c0_0 = arith.constant 0 : index
    %0 = vector.load %arg1[%c0, %c0_0] : memref<2x400xbf16, #tpu.memory_space<vmem>>, vector<2x400xbf16>
    %c0_1 = arith.constant 0 : index
    %c0_2 = arith.constant 0 : index
    %1 = vector.load %arg2[%c0_1, %c0_2] : memref<400x128xbf16, #tpu.memory_space<vmem>>, vector<400x128xbf16>
    %cst = arith.constant dense<0.000000e+00> : vector<2x128xf32>
    %2 = tpu.matmul %0, %1, %cst {dimension_numbers = #tpu.dot_dimension_numbers<[1], [0], [0], [1], [0, 0, 1, 1], [], []>} : vector<2x400xbf16>, vector<400x128xbf16>, vector<2x128xf32> -> vector<2x128xf32>
    %c0_3 = arith.constant 0 : index
    %c0_4 = arith.constant 0 : index
    %3 = vector.load %arg3[%c0_3, %c0_4] : memref<1x128xf32, #tpu.memory_space<vmem>>, vector<1x128xf32>
    %4 = vector.broadcast %3 : vector<1x128xf32> to vector<2x128xf32>
    %5 = arith.addf %2, %4 : vector<2x128xf32>
    %cst_5 = arith.constant 0.000000e+00 : f32
    %6 = vector.broadcast %cst_5 : f32 to vector<2x128xf32>
    %7 = arith.maximumf %5, %6 : vector<2x128xf32>
    %8 = arith.truncf %7 : vector<2x128xf32> to vector<2x128xbf16>
    %c0_6 = arith.constant 0 : index
    %c0_7 = arith.constant 0 : index
    %9 = vector.load %arg4[%c0_6, %c0_7] : memref<128x128xbf16, #tpu.memory_space<vmem>>, vector<128x128xbf16>
    %cst_8 = arith.constant dense<0.000000e+00> : vector<2x128xf32>
    %10 = tpu.matmul %8, %9, %cst_8 {dimension_numbers = #tpu.dot_dimension_numbers<[1], [0], [0], [1], [0, 0, 1, 1], [], []>} : vector<2x128xbf16>, vector<128x128xbf16>, vector<2x128xf32> -> vector<2x128xf32>
    %c0_9 = arith.constant 0 : index
    %c0_10 = arith.constant 0 : index
    %11 = vector.load %arg5[%c0_9, %c0_10] : memref<1x128xf32, #tpu.memory_space<vmem>>, vector<1x128xf32>
    %12 = vector.broadcast %11 : vector<1x128xf32> to vector<2x128xf32>
    %13 = arith.addf %10, %12 : vector<2x128xf32>
    %cst_11 = arith.constant 0.000000e+00 : f32
    %14 = vector.broadcast %cst_11 : f32 to vector<2x128xf32>
    %15 = arith.maximumf %13, %14 : vector<2x128xf32>
    %16 = arith.truncf %15 : vector<2x128xf32> to vector<2x128xbf16>
    %c0_12 = arith.constant 0 : index
    %c0_13 = arith.constant 0 : index
    %17 = vector.load %arg6[%c0_12, %c0_13] : memref<128x128xbf16, #tpu.memory_space<vmem>>, vector<128x128xbf16>
    %cst_14 = arith.constant dense<0.000000e+00> : vector<2x128xf32>
    %18 = tpu.matmul %16, %17, %cst_14 {dimension_numbers = #tpu.dot_dimension_numbers<[1], [0], [0], [1], [0, 0, 1, 1], [], []>} : vector<2x128xbf16>, vector<128x128xbf16>, vector<2x128xf32> -> vector<2x128xf32>
    %c0_15 = arith.constant 0 : index
    %c0_16 = arith.constant 0 : index
    %19 = vector.load %arg7[%c0_15, %c0_16] : memref<1x128xf32, #tpu.memory_space<vmem>>, vector<1x128xf32>
    %20 = vector.broadcast %19 : vector<1x128xf32> to vector<2x128xf32>
    %21 = arith.addf %18, %20 : vector<2x128xf32>
    %c0_17 = arith.constant 0 : index
    %c0_18 = arith.constant 0 : index
    %22 = vector.load %arg8[%c0_17, %c0_18] : memref<2x128xf32, #tpu.memory_space<vmem>>, vector<2x128xf32>
    tpu.vector_store %arg8[%c0_17, %c0_18], %21 {strides = array<i32>} : memref<2x128xf32, #tpu.memory_space<vmem>>, vector<2x128xf32>,
    return
  }
  func.func @transform_0(%arg0: i32) -> (i32, i32) {
    %c0_i32 = arith.constant 0 : i32
    %c0_i32_0 = arith.constant 0 : i32
    return %arg0, %c0_i32 : i32, i32
  }
  func.func @transform_1(%arg0: i32) -> (i32, i32) {
    %c0_i32 = arith.constant 0 : i32
    %c0_i32_0 = arith.constant 0 : i32
    %c0_i32_1 = arith.constant 0 : i32
    return %c0_i32, %c0_i32_0 : i32, i32
  }
  func.func @transform_2(%arg0: i32) -> (i32, i32) {
    %c0_i32 = arith.constant 0 : i32
    %c0_i32_0 = arith.constant 0 : i32
    %c0_i32_1 = arith.constant 0 : i32
    return %c0_i32, %c0_i32_0 : i32, i32
  }
  func.func @transform_3(%arg0: i32) -> (i32, i32) {
    %c0_i32 = arith.constant 0 : i32
    %c0_i32_0 = arith.constant 0 : i32
    %c0_i32_1 = arith.constant 0 : i32
    return %c0_i32, %c0_i32_0 : i32, i32
  }
  func.func @transform_4(%arg0: i32) -> (i32, i32) {
    %c0_i32 = arith.constant 0 : i32
    %c0_i32_0 = arith.constant 0 : i32
    %c0_i32_1 = arith.constant 0 : i32
    return %c0_i32, %c0_i32_0 : i32, i32
  }
  func.func @transform_5(%arg0: i32) -> (i32, i32) {
    %c0_i32 = arith.constant 0 : i32
    %c0_i32_0 = arith.constant 0 : i32
    %c0_i32_1 = arith.constant 0 : i32
    return %c0_i32, %c0_i32_0 : i32, i32
  }
  func.func @transform_6(%arg0: i32) -> (i32, i32) {
    %c0_i32 = arith.constant 0 : i32
    %c0_i32_0 = arith.constant 0 : i32
    %c0_i32_1 = arith.constant 0 : i32
    return %c0_i32, %c0_i32_0 : i32, i32
  }
  func.func @transform_7(%arg0: i32) -> (i32, i32) {
    %c0_i32 = arith.constant 0 : i32
    %c0_i32_0 = arith.constant 0 : i32
    return %arg0, %c0_i32 : i32, i32
  }
}

</mosaic_0001>

<llo_original>
// kernel: net_forward.3
$region0: #{net_forward.3}
  #allocation0 [shape = 'u32[]', space=smem, size = 0x4, offset = 0x4, fixed_abs, tag = 'smem constant byte address 0x4 - core index']
  #allocation1 [shape = 'u32[72,128]{1,0:T(1,128)}', space=vmem, size = 0x9000, scoped, tag = 'internal scratch']
  %s0 = inlined_call_operand.vmem [shape: bf16[392,36], index: 0, kind: input, shape index: {}]
  %s1 = inlined_call_operand.vmem [shape: bf16[36,512], index: 1, kind: input, shape index: {}]
  %s2 = inlined_call_operand.vmem [shape: f32[1,128], index: 2, kind: input, shape index: {}]
  %s3 = inlined_call_operand.vmem [shape: bf16[392,128], index: 3, kind: output, shape index: {}]
  %s4 = sld [smem:[#allocation0]]
  $region89: #{net_forward.3} parent=0
    _
  %s6 = ssub.s32 1, %s4
  %s7 = scalar_select 0, %s6, %s4
  $region1: #{net_forward.3} parent=0
    #allocation2 [shape = 'u8[102400]{0}', space=vmem, size = 0x19000, scoped, tag = 'output window, operand 0']
    loop: start=0, step=1, limit=4
    $region2: #{net_forward.3} parent=1 // loop_pre_header
      _
    $region3: #{net_forward.3} parent=1 // loop_header
      %s9 = sphi 0, %s13
      %p10 = scmp.ge.s32.totalorder %s9, 4
      %s19 = sphi 0, %s21
      %s22 = sphi 0, %s19
      %s23 = sphi 0, %s22
      %s39 = sphi 0, %s23
      %s43 = sphi 0, %s43
      %s45 = sphi 0, %s43
      %s46 = sphi 0, %s45
      %s60 = sphi 0, %s46
      %s64 = sphi 0, %s64
      %s66 = sphi 0, %s64
      %s67 = sphi 0, %s66
      %s81 = sphi 0, %s67
      %s87 = sphi 0, %s89
      %s90 = sphi 0, %s87
      %s91 = sphi 0, %s90
      %s107 = sphi 0, %s91
    $region4: #{net_forward.3} parent=1 // loop_header_branch
      %12 = sbr.rel (%p10) target = $region8
    $region5: #{net_forward.3} parent=1 // loop_body
      %s14 = ssub.s32 %s9, 1
      %s15 = ssub.s32 %s9, 2
      %s16 = sadd.s32 %s9, 1
      %s17 = ssub.s32 %s9, %s16
      %p18 = scmp.eq.s32.totalorder %s17, 0
      %s20 = sadd.s32 %s19, 1
      %s21 = scalar_select %p18, %s19, %s20
      %p24 = pneg %p18
      %p25 = scmp.eq.s32.totalorder %s9, 1
      %p26 = por %p24, %p25
      %p27 = scmp.ne.s32.totalorder %s19, %s22
      %p28 = scmp.eq.s32.totalorder %s9, 0
      %p29 = por %p27, %p28
      %p30 = scmp.ne.s32.totalorder %s19, %s22
      %p31 = scmp.eq.s32.totalorder %s14, 1
      %p32 = por %p30, %p31
      %p33 = scmp.ne.s32.totalorder %s22, %s23
      %p34 = scmp.eq.s32.totalorder %s14, 0
      %p35 = por %p33, %p34
      %p36 = scmp.ne.s32.totalorder %s22, %s23
      %p37 = scmp.eq.s32.totalorder %s15, 1
      %p38 = por %p36, %p37
      %p40 = scmp.ne.s32.totalorder %s23, %s39
      %p41 = scmp.eq.s32.totalorder %s15, 0
      %p42 = por %p40, %p41
      %s44 = sadd.s32 %s43, 1
      %p47 = scmp.eq.s32.totalorder %s9, 1
      %p48 = scmp.ne.s32.totalorder %s43, %s45
      %p49 = scmp.eq.s32.totalorder %s9, 0
      %p50 = por %p48, %p49
      %p51 = scmp.ne.s32.totalorder %s43, %s45
      %p52 = scmp.eq.s32.totalorder %s14, 1
      %p53 = por %p51, %p52
      %p54 = scmp.ne.s32.totalorder %s45, %s46
      %p55 = scmp.eq.s32.totalorder %s14, 0
      %p56 = por %p54, %p55
      %p57 = scmp.ne.s32.totalorder %s45, %s46
      %p58 = scmp.eq.s32.totalorder %s15, 1
      %p59 = por %p57, %p58
      %p61 = scmp.ne.s32.totalorder %s46, %s60
      %p62 = scmp.eq.s32.totalorder %s15, 0
      %p63 = por %p61, %p62
      %s65 = sadd.s32 %s64, 1
      %p68 = scmp.eq.s32.totalorder %s9, 1
      %p69 = scmp.ne.s32.totalorder %s64, %s66
      %p70 = scmp.eq.s32.totalorder %s9, 0
      %p71 = por %p69, %p70
      %p72 = scmp.ne.s32.totalorder %s64, %s66
      %p73 = scmp.eq.s32.totalorder %s14, 1
      %p74 = por %p72, %p73
      %p75 = scmp.ne.s32.totalorder %s66, %s67
      %p76 = scmp.eq.s32.totalorder %s14, 0
      %p77 = por %p75, %p76
      %p78 = scmp.ne.s32.totalorder %s66, %s67
      %p79 = scmp.eq.s32.totalorder %s15, 1
      %p80 = por %p78, %p79
      %p82 = scmp.ne.s32.totalorder %s67, %s81
      %p83 = scmp.eq.s32.totalorder %s15, 0
      %p84 = por %p82, %p83
      %s85 = ssub.s32 %s9, %s16
      %p86 = scmp.eq.s32.totalorder %s85, 0
      %s88 = sadd.s32 %s87, 1
      %s89 = scalar_select %p86, %s87, %s88
      %p92 = pneg %p86
      %p93 = scmp.eq.s32.totalorder %s9, 1
      %p94 = por %p92, %p93
      %p95 = scmp.ne.s32.totalorder %s87, %s90
      %p96 = scmp.eq.s32.totalorder %s9, 0
      %p97 = por %p95, %p96
      %p98 = scmp.ne.s32.totalorder %s87, %s90
      %p99 = scmp.eq.s32.totalorder %s14, 1
      %p100 = por %p98, %p99
      %p101 = scmp.ne.s32.totalorder %s90, %s91
      %p102 = scmp.eq.s32.totalorder %s14, 0
      %p103 = por %p101, %p102
      %p104 = scmp.ne.s32.totalorder %s90, %s91
      %p105 = scmp.eq.s32.totalorder %s15, 1
      %p106 = por %p104, %p105
      %p108 = scmp.ne.s32.totalorder %s91, %s107
      %p109 = scmp.eq.s32.totalorder %s15, 0
      %p110 = por %p108, %p109
      %p111 = scmp.le.s32.totalorder 1, %s9
      %p112 = scmp.lt.s32.totalorder %s9, 3
      %p113 = pnand %p111, %p112
      %p114 = pneg %p113
      // Predicated region
      $region9: #{net_forward.3} parent=5 // pred_check
        _
      $region10: #{net_forward.3} parent=5 // pred_check_branch
        %116 = sbr.rel (%p113) target = $region12
      $region11: #{net_forward.3} parent=5 // pred_region
        %s117 = ssub.s32 %s9, 1
        // Predicated region
        $region13: #{net_forward.3} parent=11 // pred_check
          %p118 = pneg %p56
        $region14: #{net_forward.3} parent=11 // pred_check_branch
          %120 = sbr.rel (%p118) target = $region16
        $region15: #{net_forward.3} parent=11 // pred_region
          _
        $region16: #{net_forward.3} parent=11 // pred_fallthru
          _
        // Predicated region
        $region17: #{net_forward.3} parent=11 // pred_check
          %p121 = pneg %p77
        $region18: #{net_forward.3} parent=11 // pred_check_branch
          %123 = sbr.rel (%p121) target = $region20
        $region19: #{net_forward.3} parent=11 // pred_region
          _
        $region20: #{net_forward.3} parent=11 // pred_fallthru
          _
      $region12: #{net_forward.3} parent=5 // pred_fallthru
        _
      %p124 = scmp.lt.s32.totalorder %s9, 2
      // Predicated region
      $region21: #{net_forward.3} parent=5 // pred_check
        %p125 = pneg %p124
      $region22: #{net_forward.3} parent=5 // pred_check_branch
        %127 = sbr.rel (%p125) target = $region24
      $region23: #{net_forward.3} parent=5 // pred_region
        // Predicated region
        $region25: #{net_forward.3} parent=23 // pred_check
          %p128 = pneg %p29
        $region26: #{net_forward.3} parent=23 // pred_check_branch
          %130 = sbr.rel (%p128) target = $region28
        $region27: #{net_forward.3} parent=23 // pred_region
          %s131 = smul.u32 25, %s9
          %s132 = ssub.s32 49, %s131
          %p133 = scmp.lt.s32.totalorder %s132, 25
          %s134 = scalar_select %p133, %s132, 25
          %s135 = smul.u32 4, %s134
          %p136 = scmp.lt.s32.totalorder %s131, 48
          %s137 = scalar_select %p136, %s131, 48
          %s138 = smul.addr %s137, 4
          %s139 = scalar_lea.vmem %s0, %s138
          %s140 = smul.u32 25, %s9
          %s141 = ssub.s32 49, %s140
          %p142 = scmp.lt.s32.totalorder %s141, 25
          %s143 = scalar_select %p142, %s141, 25
          %s144 = smul.u32 4, %s143
        $region28: #{net_forward.3} parent=23 // pred_fallthru
          _
      $region24: #{net_forward.3} parent=5 // pred_fallthru
        _
      %p145 = scmp.le.s32.totalorder 1, %s9
      %p146 = scmp.lt.s32.totalorder %s9, 3
      %p147 = pnand %p145, %p146
      %p148 = pneg %p147
      // Predicated region
      $region29: #{net_forward.3} parent=5 // pred_check
        _
      $region30: #{net_forward.3} parent=5 // pred_check_branch
        %150 = sbr.rel (%p147) target = $region32
      $region31: #{net_forward.3} parent=5 // pred_region
        %s151 = ssub.s32 %s9, 1
        %s152 = smul.u32 25, %s14
        %s153 = ssub.s32 49, %s152
        %p154 = scmp.lt.s32.totalorder %s153, 25
        %s155 = scalar_select %p154, %s153, 25
        %s156 = smul.u32 4, %s155
        %p157 = scmp.lt.s32.totalorder %s152, 48
        %s158 = scalar_select %p157, %s152, 48
        %s159 = smul.addr %s158, 4
        %s160 = scalar_lea.vmem %s0, %s159
        %p161 = pneg %p35
        %p162 = pneg %p32
        %p163 = pneg %p56
        %p164 = pneg %p53
        %p165 = pneg %p77
        %p166 = pneg %p74
        %p167 = pneg %p103
        %p168 = pneg %p100
        %s169 = sand.u32 %s90, 1
        %s170 = sand.u32 %s90, 1
        %s171 = smul.addr %s170, 100
        %s172 = scalar_lea.vmem [#allocation2], %s171
        %s173 = smul.u32 25, %s14
        %s174 = ssub.s32 49, %s173
        %p175 = scmp.lt.s32.totalorder %s174, 25
        %s176 = scalar_select %p175, %s174, 25
        %s177 = smul.u32 4, %s176
        %p178 = scmp.lt.s32.totalorder %s173, 48
        %s179 = scalar_select %p178, %s173, 48
        %s180 = smul.addr %s179, 4
        %s181 = scalar_lea.vmem %s0, %s180
        %s182 = smul.u32 25, %s14
        %s183 = ssub.s32 49, %s182
        %p184 = scmp.lt.s32.totalorder %s183, 25
        %s185 = scalar_select %p184, %s183, 25
        %s186 = smul.u32 4, %s185
        %s187 = smul.u32 25, %s14
        %s188 = ssub.s32 49, %s187
        %p189 = scmp.lt.s32.totalorder %s188, 25
        %s190 = scalar_select %p189, %s188, 25
        %s191 = smul.u32 4, %s190
        %v193 = vld [vmem:[%s181] sm:$0xf]
        %v194 = vld [vmem:[%s181 + $0x4] sm:$0xf]
        %v195 = vld [vmem:[%s181 + $0x8] sm:$0xf]
        %v196 = vld [vmem:[%s181 + $0xc] sm:$0xf]
        %v197 = vld [vmem:[%s181 + $0x10] sm:$0xf]
        %v198 = vld [vmem:[%s181 + $0x14] sm:$0xf]
        %v199 = vld [vmem:[%s181 + $0x18] sm:$0xf]
        %v200 = vld [vmem:[%s181 + $0x1c] sm:$0xf]
        %v201 = vld [vmem:[%s181 + $0x20] sm:$0xf]
        %v202 = vld [vmem:[%s181 + $0x24] sm:$0xf]
        %v203 = vld [vmem:[%s181 + $0x28] sm:$0xf]
        %v204 = vld [vmem:[%s181 + $0x2c] sm:$0xf]
        %v205 = vld [vmem:[%s181 + $0x30] sm:$0xf]
        %v206 = vld [vmem:[%s181 + $0x34] sm:$0xf]
        %v207 = vld [vmem:[%s181 + $0x38] sm:$0xf]
        %v208 = vld [vmem:[%s181 + $0x3c] sm:$0xf]
        %v209 = vld [vmem:[%s181 + $0x40] sm:$0xf]
        %v210 = vld [vmem:[%s181 + $0x44] sm:$0xf]
        %v211 = vld [vmem:[%s181 + $0x48] sm:$0xf]
        %v212 = vld [vmem:[%s181 + $0x4c] sm:$0xf]
        %v213 = vld [vmem:[%s181 + $0x50] sm:$0xf]
        %v214 = vld [vmem:[%s181 + $0x54] sm:$0xf]
        %v215 = vld [vmem:[%s181 + $0x58] sm:$0xf]
        %v216 = vld [vmem:[%s181 + $0x5c] sm:$0xf]
        %v217 = vld [vmem:[%s181 + $0x60] sm:$0xf]
        %v218 = vld [vmem:[%s1] sm:$0xff]
        %v219 = vld [vmem:[%s1 + $0x8] sm:$0xff]
        %v220 = vld [vmem:[%s1 + $0x10] sm:$0xff]
        %v221 = vld [vmem:[%s1 + $0x18] sm:$0xff]
        %v222 = vld [vmem:[%s1 + $0x20] sm:$0xff]
        %v223 = vld [vmem:[%s1 + $0x28] sm:$0xff]
        %v224 = vld [vmem:[%s1 + $0x30] sm:$0xff]
        %v225 = vld [vmem:[%s1 + $0x38] sm:$0xff]
        %v226 = vld [vmem:[%s1 + $0x40] sm:$0x33]
        %v227 = vld [vmem:[%s1 + $0x48] sm:$0x33]
        %v253 = vunpack.c.l.b16 %v193
        %v254 = vunpack.c.l.b16 %v194
        %v255 = vunpack.c.l.b16 %v195
        %v256 = vunpack.c.l.b16 %v196
        %v257 = vunpack.c.l.b16 %v197
        %v258 = vunpack.c.l.b16 %v198
        %v259 = vunpack.c.l.b16 %v199
        %v260 = vunpack.c.l.b16 %v200
        %v261 = vunpack.c.l.b16 %v201
        %v262 = vunpack.c.l.b16 %v202
        %v263 = vunpack.c.l.b16 %v203
        %v264 = vunpack.c.l.b16 %v204
        %v265 = vunpack.c.l.b16 %v205
        %v266 = vunpack.c.l.b16 %v206
        %v267 = vunpack.c.l.b16 %v207
        %v268 = vunpack.c.l.b16 %v208
        %v269 = vunpack.c.l.b16 %v209
        %v270 = vunpack.c.l.b16 %v210
        %v271 = vunpack.c.l.b16 %v211
        %v272 = vunpack.c.l.b16 %v212
        %v273 = vunpack.c.l.b16 %v213
        %v274 = vunpack.c.l.b16 %v214
        %v275 = vunpack.c.l.b16 %v215
        %v276 = vunpack.c.l.b16 %v216
        %v277 = vunpack.c.l.b16 %v217
        %v278 = vpack.c.b16 %v254, %v253
        %v279 = vpack.c.b16 %v256, %v255
        %v280 = vpack.c.b16 %v258, %v257
        %v281 = vpack.c.b16 %v260, %v259
        %v282 = vpack.c.b16 %v262, %v261
        %v283 = vpack.c.b16 %v264, %v263
        %v284 = vpack.c.b16 %v266, %v265
        %v285 = vpack.c.b16 %v268, %v267
        %v286 = vpack.c.b16 %v270, %v269
        %v287 = vpack.c.b16 %v272, %v271
        %v288 = vpack.c.b16 %v274, %v273
        %v289 = vpack.c.b16 %v276, %v275
        %v290 = vpack.c.b16 %v277, %v277
        %v301 = vunpack.c.l.b16 %v218
        %v302 = vunpack.c.h.b16 %v218
        %v303 = vunpack.c.l.b16 %v219
        %v304 = vunpack.c.h.b16 %v219
        %v305 = vunpack.c.l.b16 %v220
        %v306 = vunpack.c.h.b16 %v220
        %v307 = vunpack.c.l.b16 %v221
        %v308 = vunpack.c.h.b16 %v221
        %v309 = vunpack.c.l.b16 %v222
        %v310 = vunpack.c.h.b16 %v222
        %v311 = vunpack.c.l.b16 %v223
        %v312 = vunpack.c.h.b16 %v223
        %v313 = vunpack.c.l.b16 %v224
        %v314 = vunpack.c.h.b16 %v224
        %v315 = vunpack.c.l.b16 %v225
        %v316 = vunpack.c.h.b16 %v225
        %v317 = vunpack.c.l.b16 %v226
        %v318 = vunpack.c.h.b16 %v226
        %v319 = vunpack.c.l.b16 %v227
        %v320 = vunpack.c.h.b16 %v227
        %v321 = vpack.c.b16 %v305, %v301
        %v322 = vpack.c.b16 %v306, %v302
        %v323 = vpack.c.b16 %v307, %v303
        %v324 = vpack.c.b16 %v308, %v304
        %v325 = vpack.c.b16 %v313, %v309
        %v326 = vpack.c.b16 %v314, %v310
        %v327 = vpack.c.b16 %v315, %v311
        %v328 = vpack.c.b16 %v316, %v312
        %v329 = vpack.c.b16 %v317, %v317
        %v330 = vpack.c.b16 %v318, %v318
        %v331 = vpack.c.b16 %v319, %v319
        %v332 = vpack.c.b16 %v320, %v320
        %vm341 = vcmask 293888
        %v343 = vsel %vm341, %v278, 0
        %v346 = vsel %vm341, %v279, 0
        %v349 = vsel %vm341, %v280, 0
        %v352 = vsel %vm341, %v281, 0
        %v355 = vsel %vm341, %v282, 0
        %v358 = vsel %vm341, %v283, 0
        %v361 = vsel %vm341, %v284, 0
        %v364 = vsel %vm341, %v285, 0
        %v367 = vsel %vm341, %v286, 0
        %v370 = vsel %vm341, %v287, 0
        %v373 = vsel %vm341, %v288, 0
        %v376 = vsel %vm341, %v289, 0
        %v379 = vsel %vm341, %v290, 0
        %vm381 = vcmask 1041408
        %v383 = vsel %vm381, %v329, 0
        %v386 = vsel %vm381, %v330, 0
        %v389 = vsel %vm381, %v331, 0
        %v392 = vsel %vm381, %v332, 0
        %394 = vmatpush.bf16.msra.mxu0 0
        %395 = vmatpush.bf16.msra.mxu0 0
        %396 = vmatpush.bf16.msra.mxu0 0
        %397 = vmatpush.bf16.msra.mxu0 0
        %398 = vmatpush.bf16.msra.mxu0 0
        %399 = vmatpush.bf16.msra.mxu0 %v383
        %400 = vmatpush.bf16.msra.mxu0 %v325
        %401 = vmatpush.bf16.msra.mxu0 %v321
        %402 = vmatmul.bf16.gmra.mxu0 %v343
        %v403 = vpop.f32.mrf.mxu0
        %v404 = vadd.f32 0.0, %v403
        %v405 = vpop.f32.mrf.mxu0
        %v406 = vadd.f32 0.0, %v405
        %407 = vmatmul.bf16.gmra.mxu0 %v346
        %v408 = vpop.f32.mrf.mxu0
        %v409 = vadd.f32 0.0, %v408
        %v410 = vpop.f32.mrf.mxu0
        %v411 = vadd.f32 0.0, %v410
        %412 = vmatmul.bf16.gmra.mxu0 %v349
        %v413 = vpop.f32.mrf.mxu0
        %v414 = vadd.f32 0.0, %v413
        %v415 = vpop.f32.mrf.mxu0
        %v416 = vadd.f32 0.0, %v415
        %417 = vmatmul.bf16.gmra.mxu0 %v352
        %v418 = vpop.f32.mrf.mxu0
        %v419 = vadd.f32 0.0, %v418
        %v420 = vpop.f32.mrf.mxu0
        %v421 = vadd.f32 0.0, %v420
        %422 = vmatmul.bf16.gmra.mxu0 %v355
        %v423 = vpop.f32.mrf.mxu0
        %v424 = vadd.f32 0.0, %v423
        %v425 = vpop.f32.mrf.mxu0
        %v426 = vadd.f32 0.0, %v425
        %427 = vmatmul.bf16.gmra.mxu0 %v358
        %v428 = vpop.f32.mrf.mxu0
        %v429 = vadd.f32 0.0, %v428
        %v430 = vpop.f32.mrf.mxu0
        %v431 = vadd.f32 0.0, %v430
        %432 = vmatmul.bf16.gmra.mxu0 %v361
        %v433 = vpop.f32.mrf.mxu0
        %v434 = vadd.f32 0.0, %v433
        %v435 = vpop.f32.mrf.mxu0
        %v436 = vadd.f32 0.0, %v435
        %437 = vmatmul.bf16.gmra.mxu0 %v364
        %v438 = vpop.f32.mrf.mxu0
        %v439 = vadd.f32 0.0, %v438
        %v440 = vpop.f32.mrf.mxu0
        %v441 = vadd.f32 0.0, %v440
        %442 = vmatmul.bf16.gmra.mxu0 %v367
        %v443 = vpop.f32.mrf.mxu0
        %v444 = vadd.f32 0.0, %v443
        %v445 = vpop.f32.mrf.mxu0
        %v446 = vadd.f32 0.0, %v445
        %447 = vmatmul.bf16.gmra.mxu0 %v370
        %v448 = vpop.f32.mrf.mxu0
        %v449 = vadd.f32 0.0, %v448
        %v450 = vpop.f32.mrf.mxu0
        %v451 = vadd.f32 0.0, %v450
        %452 = vmatmul.bf16.gmra.mxu0 %v373
        %v453 = vpop.f32.mrf.mxu0
        %v454 = vadd.f32 0.0, %v453
        %v455 = vpop.f32.mrf.mxu0
        %v456 = vadd.f32 0.0, %v455
        %457 = vmatmul.bf16.gmra.mxu0 %v376
        %v458 = vpop.f32.mrf.mxu0
        %v459 = vadd.f32 0.0, %v458
        %v460 = vpop.f32.mrf.mxu0
        %v461 = vadd.f32 0.0, %v460
        %462 = vmatmul.bf16.gmra.mxu0 %v379
        %v463 = vpop.f32.mrf.mxu0
        %v464 = vadd.f32 0.0, %v463
        %v465 = vpop.f32.mrf.mxu0
        %466 = vdwg.mxu0
        %467 = vmatpush.bf16.msra.mxu0 0
        %468 = vmatpush.bf16.msra.mxu0 0
        %469 = vmatpush.bf16.msra.mxu0 0
        %470 = vmatpush.bf16.msra.mxu0 0
        %471 = vmatpush.bf16.msra.mxu0 0
        %472 = vmatpush.bf16.msra.mxu0 %v386
        %473 = vmatpush.bf16.msra.mxu0 %v326
        %474 = vmatpush.bf16.msra.mxu0 %v322
        %475 = vmatmul.bf16.gmra.mxu0 %v343
        %v476 = vpop.f32.mrf.mxu0
        %v477 = vadd.f32 0.0, %v476
        %v478 = vpop.f32.mrf.mxu0
        %v479 = vadd.f32 0.0, %v478
        %480 = vmatmul.bf16.gmra.mxu0 %v346
        %v481 = vpop.f32.mrf.mxu0
        %v482 = vadd.f32 0.0, %v481
        %v483 = vpop.f32.mrf.mxu0
        %v484 = vadd.f32 0.0, %v483
        %485 = vmatmul.bf16.gmra.mxu0 %v349
        %v486 = vpop.f32.mrf.mxu0
        %v487 = vadd.f32 0.0, %v486
        %v488 = vpop.f32.mrf.mxu0
        %v489 = vadd.f32 0.0, %v488
        %490 = vmatmul.bf16.gmra.mxu0 %v352
        %v491 = vpop.f32.mrf.mxu0
        %v492 = vadd.f32 0.0, %v491
        %v493 = vpop.f32.mrf.mxu0
        %v494 = vadd.f32 0.0, %v493
        %495 = vmatmul.bf16.gmra.mxu0 %v355
        %v496 = vpop.f32.mrf.mxu0
        %v497 = vadd.f32 0.0, %v496
        %v498 = vpop.f32.mrf.mxu0
        %v499 = vadd.f32 0.0, %v498
        %500 = vmatmul.bf16.gmra.mxu0 %v358
        %v501 = vpop.f32.mrf.mxu0
        %v502 = vadd.f32 0.0, %v501
        %v503 = vpop.f32.mrf.mxu0
        %v504 = vadd.f32 0.0, %v503
        %505 = vmatmul.bf16.gmra.mxu0 %v361
        %v506 = vpop.f32.mrf.mxu0
        %v507 = vadd.f32 0.0, %v506
        %v508 = vpop.f32.mrf.mxu0
        %v509 = vadd.f32 0.0, %v508
        %510 = vmatmul.bf16.gmra.mxu0 %v364
        %v511 = vpop.f32.mrf.mxu0
        %v512 = vadd.f32 0.0, %v511
        %v513 = vpop.f32.mrf.mxu0
        %v514 = vadd.f32 0.0, %v513
        %515 = vmatmul.bf16.gmra.mxu0 %v367
        %v516 = vpop.f32.mrf.mxu0
        %v517 = vadd.f32 0.0, %v516
        %v518 = vpop.f32.mrf.mxu0
        %v519 = vadd.f32 0.0, %v518
        %520 = vmatmul.bf16.gmra.mxu0 %v370
        %v521 = vpop.f32.mrf.mxu0
        %v522 = vadd.f32 0.0, %v521
        %v523 = vpop.f32.mrf.mxu0
        %v524 = vadd.f32 0.0, %v523
        %525 = vmatmul.bf16.gmra.mxu0 %v373
        %v526 = vpop.f32.mrf.mxu0
        %v527 = vadd.f32 0.0, %v526
        %v528 = vpop.f32.mrf.mxu0
        %v529 = vadd.f32 0.0, %v528
        %530 = vmatmul.bf16.gmra.mxu0 %v376
        %v531 = vpop.f32.mrf.mxu0
        %v532 = vadd.f32 0.0, %v531
        %v533 = vpop.f32.mrf.mxu0
        %v534 = vadd.f32 0.0, %v533
        %535 = vmatmul.bf16.gmra.mxu0 %v379
        %v536 = vpop.f32.mrf.mxu0
        %v537 = vadd.f32 0.0, %v536
        %v538 = vpop.f32.mrf.mxu0
        %539 = vdwg.mxu0
        %540 = vmatpush.bf16.msra.mxu0 0
        %541 = vmatpush.bf16.msra.mxu0 0
        %542 = vmatpush.bf16.msra.mxu0 0
        %543 = vmatpush.bf16.msra.mxu0 0
        %544 = vmatpush.bf16.msra.mxu0 0
        %545 = vmatpush.bf16.msra.mxu0 %v389
        %546 = vmatpush.bf16.msra.mxu0 %v327
        %547 = vmatpush.bf16.msra.mxu0 %v323
        %548 = vmatmul.bf16.gmra.mxu0 %v343
        %v549 = vpop.f32.mrf.mxu0
        %v550 = vadd.f32 0.0, %v549
        %v551 = vpop.f32.mrf.mxu0
        %v552 = vadd.f32 0.0, %v551
        %553 = vmatmul.bf16.gmra.mxu0 %v346
        %v554 = vpop.f32.mrf.mxu0
        %v555 = vadd.f32 0.0, %v554
        %v556 = vpop.f32.mrf.mxu0
        %v557 = vadd.f32 0.0, %v556
        %558 = vmatmul.bf16.gmra.mxu0 %v349
        %v559 = vpop.f32.mrf.mxu0
        %v560 = vadd.f32 0.0, %v559
        %v561 = vpop.f32.mrf.mxu0
        %v562 = vadd.f32 0.0, %v561
        %563 = vmatmul.bf16.gmra.mxu0 %v352
        %v564 = vpop.f32.mrf.mxu0
        %v565 = vadd.f32 0.0, %v564
        %v566 = vpop.f32.mrf.mxu0
        %v567 = vadd.f32 0.0, %v566
        %568 = vmatmul.bf16.gmra.mxu0 %v355
        %v569 = vpop.f32.mrf.mxu0
        %v570 = vadd.f32 0.0, %v569
        %v571 = vpop.f32.mrf.mxu0
        %v572 = vadd.f32 0.0, %v571
        %573 = vmatmul.bf16.gmra.mxu0 %v358
        %v574 = vpop.f32.mrf.mxu0
        %v575 = vadd.f32 0.0, %v574
        %v576 = vpop.f32.mrf.mxu0
        %v577 = vadd.f32 0.0, %v576
        %578 = vmatmul.bf16.gmra.mxu0 %v361
        %v579 = vpop.f32.mrf.mxu0
        %v580 = vadd.f32 0.0, %v579
        %v581 = vpop.f32.mrf.mxu0
        %v582 = vadd.f32 0.0, %v581
        %583 = vmatmul.bf16.gmra.mxu0 %v364
        %v584 = vpop.f32.mrf.mxu0
        %v585 = vadd.f32 0.0, %v584
        %v586 = vpop.f32.mrf.mxu0
        %v587 = vadd.f32 0.0, %v586
        %588 = vmatmul.bf16.gmra.mxu0 %v367
        %v589 = vpop.f32.mrf.mxu0
        %v590 = vadd.f32 0.0, %v589
        %v591 = vpop.f32.mrf.mxu0
        %v592 = vadd.f32 0.0, %v591
        %593 = vmatmul.bf16.gmra.mxu0 %v370
        %v594 = vpop.f32.mrf.mxu0
        %v595 = vadd.f32 0.0, %v594
        %v596 = vpop.f32.mrf.mxu0
        %v597 = vadd.f32 0.0, %v596
        %598 = vmatmul.bf16.gmra.mxu0 %v373
        %v599 = vpop.f32.mrf.mxu0
        %v600 = vadd.f32 0.0, %v599
        %v601 = vpop.f32.mrf.mxu0
        %v602 = vadd.f32 0.0, %v601
        %603 = vmatmul.bf16.gmra.mxu0 %v376
        %v604 = vpop.f32.mrf.mxu0
        %v605 = vadd.f32 0.0, %v604
        %v606 = vpop.f32.mrf.mxu0
        %v607 = vadd.f32 0.0, %v606
        %608 = vmatmul.bf16.gmra.mxu0 %v379
        %v609 = vpop.f32.mrf.mxu0
        %v610 = vadd.f32 0.0, %v609
        %v611 = vpop.f32.mrf.mxu0
        %612 = vdwg.mxu0
        %613 = vmatpush.bf16.msra.mxu0 0
        %614 = vmatpush.bf16.msra.mxu0 0
        %615 = vmatpush.bf16.msra.mxu0 0
        %616 = vmatpush.bf16.msra.mxu0 0
        %617 = vmatpush.bf16.msra.mxu0 0
        %618 = vmatpush.bf16.msra.mxu0 %v392
        %619 = vmatpush.bf16.msra.mxu0 %v328
        %620 = vmatpush.bf16.msra.mxu0 %v324
        %621 = vmatmul.bf16.gmra.mxu0 %v343
        %v622 = vpop.f32.mrf.mxu0
        %v623 = vadd.f32 0.0, %v622
        %v624 = vpop.f32.mrf.mxu0
        %v625 = vadd.f32 0.0, %v624
        %626 = vmatmul.bf16.gmra.mxu0 %v346
        %v627 = vpop.f32.mrf.mxu0
        %v628 = vadd.f32 0.0, %v627
        %v629 = vpop.f32.mrf.mxu0
        %v630 = vadd.f32 0.0, %v629
        %631 = vmatmul.bf16.gmra.mxu0 %v349
        %v632 = vpop.f32.mrf.mxu0
        %v633 = vadd.f32 0.0, %v632
        %v634 = vpop.f32.mrf.mxu0
        %v635 = vadd.f32 0.0, %v634
        %636 = vmatmul.bf16.gmra.mxu0 %v352
        %v637 = vpop.f32.mrf.mxu0
        %v638 = vadd.f32 0.0, %v637
        %v639 = vpop.f32.mrf.mxu0
        %v640 = vadd.f32 0.0, %v639
        %641 = vmatmul.bf16.gmra.mxu0 %v355
        %v642 = vpop.f32.mrf.mxu0
        %v643 = vadd.f32 0.0, %v642
        %v644 = vpop.f32.mrf.mxu0
        %v645 = vadd.f32 0.0, %v644
        %646 = vmatmul.bf16.gmra.mxu0 %v358
        %v647 = vpop.f32.mrf.mxu0
        %v648 = vadd.f32 0.0, %v647
        %v649 = vpop.f32.mrf.mxu0
        %v650 = vadd.f32 0.0, %v649
        %651 = vmatmul.bf16.gmra.mxu0 %v361
        %v652 = vpop.f32.mrf.mxu0
        %v653 = vadd.f32 0.0, %v652
        %v654 = vpop.f32.mrf.mxu0
        %v655 = vadd.f32 0.0, %v654
        %656 = vmatmul.bf16.gmra.mxu0 %v364
        %v657 = vpop.f32.mrf.mxu0
        %v658 = vadd.f32 0.0, %v657
        %v659 = vpop.f32.mrf.mxu0
        %v660 = vadd.f32 0.0, %v659
        %661 = vmatmul.bf16.gmra.mxu0 %v367
        %v662 = vpop.f32.mrf.mxu0
        %v663 = vadd.f32 0.0, %v662
        %v664 = vpop.f32.mrf.mxu0
        %v665 = vadd.f32 0.0, %v664
        %666 = vmatmul.bf16.gmra.mxu0 %v370
        %v667 = vpop.f32.mrf.mxu0
        %v668 = vadd.f32 0.0, %v667
        %v669 = vpop.f32.mrf.mxu0
        %v670 = vadd.f32 0.0, %v669
        %671 = vmatmul.bf16.gmra.mxu0 %v373
        %v672 = vpop.f32.mrf.mxu0
        %v673 = vadd.f32 0.0, %v672
        %v674 = vpop.f32.mrf.mxu0
        %v675 = vadd.f32 0.0, %v674
        %676 = vmatmul.bf16.gmra.mxu0 %v376
        %v677 = vpop.f32.mrf.mxu0
        %v678 = vadd.f32 0.0, %v677
        %v679 = vpop.f32.mrf.mxu0
        %v680 = vadd.f32 0.0, %v679
        %681 = vmatmul.bf16.gmra.mxu0 %v379
        %v682 = vpop.f32.mrf.mxu0
        %v683 = vadd.f32 0.0, %v682
        %v684 = vpop.f32.mrf.mxu0
        %685 = vdwg.mxu0
        %v686 = vmax.f32 %v404, %v477
        %v687 = vmax.f32 %v406, %v479
        %v688 = vmax.f32 %v409, %v482
        %v689 = vmax.f32 %v411, %v484
        %v690 = vmax.f32 %v414, %v487
        %v691 = vmax.f32 %v416, %v489
        %v692 = vmax.f32 %v419, %v492
        %v693 = vmax.f32 %v421, %v494
        %v694 = vmax.f32 %v424, %v497
        %v695 = vmax.f32 %v426, %v499
        %v696 = vmax.f32 %v429, %v502
        %v697 = vmax.f32 %v431, %v504
        %v698 = vmax.f32 %v434, %v507
        %v699 = vmax.f32 %v436, %v509
        %v700 = vmax.f32 %v439, %v512
        %v701 = vmax.f32 %v441, %v514
        %v702 = vmax.f32 %v444, %v517
        %v703 = vmax.f32 %v446, %v519
        %v704 = vmax.f32 %v449, %v522
        %v705 = vmax.f32 %v451, %v524
        %v706 = vmax.f32 %v454, %v527
        %v707 = vmax.f32 %v456, %v529
        %v708 = vmax.f32 %v459, %v532
        %v709 = vmax.f32 %v461, %v534
        %v710 = vmax.f32 %v464, %v537
        %v711 = vmax.f32 %v550, %v623
        %v712 = vmax.f32 %v552, %v625
        %v713 = vmax.f32 %v555, %v628
        %v714 = vmax.f32 %v557, %v630
        %v715 = vmax.f32 %v560, %v633
        %v716 = vmax.f32 %v562, %v635
        %v717 = vmax.f32 %v565, %v638
        %v718 = vmax.f32 %v567, %v640
        %v719 = vmax.f32 %v570, %v643
        %v720 = vmax.f32 %v572, %v645
        %v721 = vmax.f32 %v575, %v648
        %v722 = vmax.f32 %v577, %v650
        %v723 = vmax.f32 %v580, %v653
        %v724 = vmax.f32 %v582, %v655
        %v725 = vmax.f32 %v585, %v658
        %v726 = vmax.f32 %v587, %v660
        %v727 = vmax.f32 %v590, %v663
        %v728 = vmax.f32 %v592, %v665
        %v729 = vmax.f32 %v595, %v668
        %v730 = vmax.f32 %v597, %v670
        %v731 = vmax.f32 %v600, %v673
        %v732 = vmax.f32 %v602, %v675
        %v733 = vmax.f32 %v605, %v678
        %v734 = vmax.f32 %v607, %v680
        %v735 = vmax.f32 %v610, %v683
        %v736 = vmax.f32 %v686, %v711
        %v737 = vmax.f32 %v687, %v712
        %v738 = vmax.f32 %v688, %v713
        %v739 = vmax.f32 %v689, %v714
        %v740 = vmax.f32 %v690, %v715
        %v741 = vmax.f32 %v691, %v716
        %v742 = vmax.f32 %v692, %v717
        %v743 = vmax.f32 %v693, %v718
        %v744 = vmax.f32 %v694, %v719
        %v745 = vmax.f32 %v695, %v720
        %v746 = vmax.f32 %v696, %v721
        %v747 = vmax.f32 %v697, %v722
        %v748 = vmax.f32 %v698, %v723
        %v749 = vmax.f32 %v699, %v724
        %v750 = vmax.f32 %v700, %v725
        %v751 = vmax.f32 %v701, %v726
        %v752 = vmax.f32 %v702, %v727
        %v753 = vmax.f32 %v703, %v728
        %v754 = vmax.f32 %v704, %v729
        %v755 = vmax.f32 %v705, %v730
        %v756 = vmax.f32 %v706, %v731
        %v757 = vmax.f32 %v707, %v732
        %v758 = vmax.f32 %v708, %v733
        %v759 = vmax.f32 %v709, %v734
        %v760 = vmax.f32 %v710, %v735
        %v761 = vld [vmem:[%s2] sm:$0x1]
        %v763 = vperm.slane %v761, 0
        %v765 = vadd.f32 %v736, %v763
        %v766 = vadd.f32 %v737, %v763
        %v767 = vadd.f32 %v738, %v763
        %v768 = vadd.f32 %v739, %v763
        %v769 = vadd.f32 %v740, %v763
        %v770 = vadd.f32 %v741, %v763
        %v771 = vadd.f32 %v742, %v763
        %v772 = vadd.f32 %v743, %v763
        %v773 = vadd.f32 %v744, %v763
        %v774 = vadd.f32 %v745, %v763
        %v775 = vadd.f32 %v746, %v763
        %v776 = vadd.f32 %v747, %v763
        %v777 = vadd.f32 %v748, %v763
        %v778 = vadd.f32 %v749, %v763
        %v779 = vadd.f32 %v750, %v763
        %v780 = vadd.f32 %v751, %v763
        %v781 = vadd.f32 %v752, %v763
        %v782 = vadd.f32 %v753, %v763
        %v783 = vadd.f32 %v754, %v763
        %v784 = vadd.f32 %v755, %v763
        %v785 = vadd.f32 %v756, %v763
        %v786 = vadd.f32 %v757, %v763
        %v787 = vadd.f32 %v758, %v763
        %v788 = vadd.f32 %v759, %v763
        %v789 = vadd.f32 %v760, %v763
        %v790 = vmax.f32 %v765, 0.0
        %v791 = vmax.f32 %v766, 0.0
        %v792 = vmax.f32 %v767, 0.0
        %v793 = vmax.f32 %v768, 0.0
        %v794 = vmax.f32 %v769, 0.0
        %v795 = vmax.f32 %v770, 0.0
        %v796 = vmax.f32 %v771, 0.0
        %v797 = vmax.f32 %v772, 0.0
        %v798 = vmax.f32 %v773, 0.0
        %v799 = vmax.f32 %v774, 0.0
        %v800 = vmax.f32 %v775, 0.0
        %v801 = vmax.f32 %v776, 0.0
        %v802 = vmax.f32 %v777, 0.0
        %v803 = vmax.f32 %v778, 0.0
        %v804 = vmax.f32 %v779, 0.0
        %v805 = vmax.f32 %v780, 0.0
        %v806 = vmax.f32 %v781, 0.0
        %v807 = vmax.f32 %v782, 0.0
        %v808 = vmax.f32 %v783, 0.0
        %v809 = vmax.f32 %v784, 0.0
        %v810 = vmax.f32 %v785, 0.0
        %v811 = vmax.f32 %v786, 0.0
        %v812 = vmax.f32 %v787, 0.0
        %v813 = vmax.f32 %v788, 0.0
        %v814 = vmax.f32 %v789, 0.0
        %v815 = vpack.c.bf16 %v790, %v790
        %v816 = vpack.c.bf16 %v791, %v791
        %v817 = vpack.c.bf16 %v792, %v792
        %v818 = vpack.c.bf16 %v793, %v793
        %v819 = vpack.c.bf16 %v794, %v794
        %v820 = vpack.c.bf16 %v795, %v795
        %v821 = vpack.c.bf16 %v796, %v796
        %v822 = vpack.c.bf16 %v797, %v797
        %v823 = vpack.c.bf16 %v798, %v798
        %v824 = vpack.c.bf16 %v799, %v799
        %v825 = vpack.c.bf16 %v800, %v800
        %v826 = vpack.c.bf16 %v801, %v801
        %v827 = vpack.c.bf16 %v802, %v802
        %v828 = vpack.c.bf16 %v803, %v803
        %v829 = vpack.c.bf16 %v804, %v804
        %v830 = vpack.c.bf16 %v805, %v805
        %v831 = vpack.c.bf16 %v806, %v806
        %v832 = vpack.c.bf16 %v807, %v807
        %v833 = vpack.c.bf16 %v808, %v808
        %v834 = vpack.c.bf16 %v809, %v809
        %v835 = vpack.c.bf16 %v810, %v810
        %v836 = vpack.c.bf16 %v811, %v811
        %v837 = vpack.c.bf16 %v812, %v812
        %v838 = vpack.c.bf16 %v813, %v813
        %v839 = vpack.c.bf16 %v814, %v814
        %840 = vst [vmem:[%s172] sm:$0xf] %v815
        %841 = vst [vmem:[%s172 + $0x4] sm:$0xf] %v816
        %842 = vst [vmem:[%s172 + $0x8] sm:$0xf] %v817
        %843 = vst [vmem:[%s172 + $0xc] sm:$0xf] %v818
        %844 = vst [vmem:[%s172 + $0x10] sm:$0xf] %v819
        %845 = vst [vmem:[%s172 + $0x14] sm:$0xf] %v820
        %846 = vst [vmem:[%s172 + $0x18] sm:$0xf] %v821
        %847 = vst [vmem:[%s172 + $0x1c] sm:$0xf] %v822
        %848 = vst [vmem:[%s172 + $0x20] sm:$0xf] %v823
        %849 = vst [vmem:[%s172 + $0x24] sm:$0xf] %v824
        %850 = vst [vmem:[%s172 + $0x28] sm:$0xf] %v825
        %851 = vst [vmem:[%s172 + $0x2c] sm:$0xf] %v826
        %852 = vst [vmem:[%s172 + $0x30] sm:$0xf] %v827
        %853 = vst [vmem:[%s172 + $0x34] sm:$0xf] %v828
        %854 = vst [vmem:[%s172 + $0x38] sm:$0xf] %v829
        %855 = vst [vmem:[%s172 + $0x3c] sm:$0xf] %v830
        %856 = vst [vmem:[%s172 + $0x40] sm:$0xf] %v831
        %857 = vst [vmem:[%s172 + $0x44] sm:$0xf] %v832
        %858 = vst [vmem:[%s172 + $0x48] sm:$0xf] %v833
        %859 = vst [vmem:[%s172 + $0x4c] sm:$0xf] %v834
        %860 = vst [vmem:[%s172 + $0x50] sm:$0xf] %v835
        %861 = vst [vmem:[%s172 + $0x54] sm:$0xf] %v836
        %862 = vst [vmem:[%s172 + $0x58] sm:$0xf] %v837
        %863 = vst [vmem:[%s172 + $0x5c] sm:$0xf] %v838
        %864 = vst [vmem:[%s172 + $0x60] sm:$0xf] %v839
        %s865 = sand.u32 %s90, 1
        %s866 = sand.u32 %s90, 1
        %s867 = smul.addr %s866, 100
        %s868 = scalar_lea.vmem [#allocation2], %s867
        // Predicated region
        $region33: #{net_forward.3} parent=31 // pred_check
          %p869 = pneg %p100
        $region34: #{net_forward.3} parent=31 // pred_check_branch
          %871 = sbr.rel (%p869) target = $region36
        $region35: #{net_forward.3} parent=31 // pred_region
          %s872 = smul.u32 25, %s14
          %s873 = ssub.s32 49, %s872
          %p874 = scmp.lt.s32.totalorder %s873, 25
          %s875 = scalar_select %p874, %s873, 25
          %s876 = smul.u32 4, %s875
          %p877 = scmp.ne.s32.totalorder 0, %s876
          %s878 = smul.addr %s872, 4
          %s879 = scalar_lea.vmem %s3, %s878
          // Predicated region
          $region37: #{net_forward.3} parent=35 // pred_check
            %p880 = pneg %p877
          $region38: #{net_forward.3} parent=35 // pred_check_branch
            %882 = sbr.rel (%p880) target = $region40
          $region39: #{net_forward.3} parent=35 // pred_region
            // Predicated region
            $region41: #{net_forward.3} parent=39 // pred_check
              _
            $region42: #{net_forward.3} parent=39 // pred_check_branch
              %884 = sbr.rel target = $region44
            $region43: #{net_forward.3} parent=39 // pred_region
              // Predicated region
              $region63: #{net_forward.3} parent=43 // pred_check
                _
              $region64: #{net_forward.3} parent=43 // pred_check_branch
                %983 = sbr.rel (0) target = $region66
              $region65: #{net_forward.3} parent=43 // pred_region
                %s985 = ssub.s32 16, 1
                %s986 = sdiv.u32.pop %s875, 25
                %s987 = srem.u32.pop %s875, 25
                // While loop
                $region67: #{net_forward.3} parent=65 // loop_pre_header
                  _
                $region68: #{net_forward.3} parent=65 // loop_header
                  %s989 = sphi 0, %s991
                  %p990 = scmp.ge.s32.totalorder %s989, %s986
                  %s994 = sphi 0, %s1049
                  %s995 = sphi %s868, %s1052
                  %s996 = sphi %s879, %s1053
                $region69: #{net_forward.3} parent=65 // loop_header_branch
                  %993 = sbr.rel (%p990) target = $region73
                $region70: #{net_forward.3} parent=65 // loop_body
                  %v997 = vld [vmem:[%s995] sm:%s985]
                  %998 = vst [vmem:[%s996] sm:%s985] %v997
                  %v999 = vld [vmem:[%s995 + $0x4] sm:%s985]
                  %1000 = vst [vmem:[%s996 + $0x4] sm:%s985] %v999
                  %v1001 = vld [vmem:[%s995 + $0x8] sm:%s985]
                  %1002 = vst [vmem:[%s996 + $0x8] sm:%s985] %v1001
                  %v1003 = vld [vmem:[%s995 + $0xc] sm:%s985]
                  %1004 = vst [vmem:[%s996 + $0xc] sm:%s985] %v1003
                  %v1005 = vld [vmem:[%s995 + $0x10] sm:%s985]
                  %1006 = vst [vmem:[%s996 + $0x10] sm:%s985] %v1005
                  %v1007 = vld [vmem:[%s995 + $0x14] sm:%s985]
                  %1008 = vst [vmem:[%s996 + $0x14] sm:%s985] %v1007
                  %v1009 = vld [vmem:[%s995 + $0x18] sm:%s985]
                  %1010 = vst [vmem:[%s996 + $0x18] sm:%s985] %v1009
                  %v1011 = vld [vmem:[%s995 + $0x1c] sm:%s985]
                  %1012 = vst [vmem:[%s996 + $0x1c] sm:%s985] %v1011
                  %v1013 = vld [vmem:[%s995 + $0x20] sm:%s985]
                  %1014 = vst [vmem:[%s996 + $0x20] sm:%s985] %v1013
                  %v1015 = vld [vmem:[%s995 + $0x24] sm:%s985]
                  %1016 = vst [vmem:[%s996 + $0x24] sm:%s985] %v1015
                  %v1017 = vld [vmem:[%s995 + $0x28] sm:%s985]
                  %1018 = vst [vmem:[%s996 + $0x28] sm:%s985] %v1017
                  %v1019 = vld [vmem:[%s995 + $0x2c] sm:%s985]
                  %1020 = vst [vmem:[%s996 + $0x2c] sm:%s985] %v1019
                  %v1021 = vld [vmem:[%s995 + $0x30] sm:%s985]
                  %1022 = vst [vmem:[%s996 + $0x30] sm:%s985] %v1021
                  %v1023 = vld [vmem:[%s995 + $0x34] sm:%s985]
                  %1024 = vst [vmem:[%s996 + $0x34] sm:%s985] %v1023
                  %v1025 = vld [vmem:[%s995 + $0x38] sm:%s985]
                  %1026 = vst [vmem:[%s996 + $0x38] sm:%s985] %v1025
                  %v1027 = vld [vmem:[%s995 + $0x3c] sm:%s985]
                  %1028 = vst [vmem:[%s996 + $0x3c] sm:%s985] %v1027
                  %v1029 = vld [vmem:[%s995 + $0x40] sm:%s985]
                  %1030 = vst [vmem:[%s996 + $0x40] sm:%s985] %v1029
                  %v1031 = vld [vmem:[%s995 + $0x44] sm:%s985]
                  %1032 = vst [vmem:[%s996 + $0x44] sm:%s985] %v1031
                  %v1033 = vld [vmem:[%s995 + $0x48] sm:%s985]
                  %1034 = vst [vmem:[%s996 + $0x48] sm:%s985] %v1033
                  %v1035 = vld [vmem:[%s995 + $0x4c] sm:%s985]
                  %1036 = vst [vmem:[%s996 + $0x4c] sm:%s985] %v1035
                  %v1037 = vld [vmem:[%s995 + $0x50] sm:%s985]
                  %1038 = vst [vmem:[%s996 + $0x50] sm:%s985] %v1037
                  %v1039 = vld [vmem:[%s995 + $0x54] sm:%s985]
                  %1040 = vst [vmem:[%s996 + $0x54] sm:%s985] %v1039
                  %v1041 = vld [vmem:[%s995 + $0x58] sm:%s985]
                  %1042 = vst [vmem:[%s996 + $0x58] sm:%s985] %v1041
                  %v1043 = vld [vmem:[%s995 + $0x5c] sm:%s985]
                  %1044 = vst [vmem:[%s996 + $0x5c] sm:%s985] %v1043
                  %v1045 = vld [vmem:[%s995 + $0x60] sm:%s985]
                  %1046 = vst [vmem:[%s996 + $0x60] sm:%s985] %v1045
                  %s1047 = sadd.s32 1, %s994
                  %p1048 = scmp.ge.s32.totalorder %s1047, %s986
                  %s1049 = scalar_select %p1048, 0, %s1047
                  %s1050 = smul.u32 %s1049, 100
                  %s1051 = smul.u32 %s1049, 100
                  %s1052 = scalar_lea.vmem %s868, %s1050 [#allocation2]
                  %s1053 = scalar_lea.vmem %s879, %s1051
                $region71: #{net_forward.3} parent=65 // loop_footer
                  %s991 = sadd.s32 %s989, 1
                $region72: #{net_forward.3} parent=65 // loop_footer_branch
                  %988 = sbr.rel target = $region68
                $region73: #{net_forward.3} parent=65 // loop_exit
                  _
                %s1054 = sdiv.u32.pop %s875, 25
                %s1055 = srem.u32.pop %s875, 25
                %s1056 = smul.u32 %s1054, 25
                %s1057 = smul.u32 4, %s1056
                %s1058 = scalar_lea.vmem %s868, %s1057 [#allocation2]
                %s1059 = smul.u32 4, %s1056
                %s1060 = scalar_lea.vmem %s879, %s1059
                // While loop
                $region74: #{net_forward.3} parent=65 // loop_pre_header
                  _
                $region75: #{net_forward.3} parent=65 // loop_header
                  %s1062 = sphi 0, %s1064
                  %p1063 = scmp.ge.s32.totalorder %s1062, %s1055
                  %s1067 = sphi 0, %s1074
                  %s1068 = sphi %s1058, %s1077
                  %s1069 = sphi %s1060, %s1078
                $region76: #{net_forward.3} parent=65 // loop_header_branch
                  %1066 = sbr.rel (%p1063) target = $region80
                $region77: #{net_forward.3} parent=65 // loop_body
                  %v1070 = vld [vmem:[%s1068] sm:%s985]
                  %1071 = vst [vmem:[%s1069] sm:%s985] %v1070
                  %s1072 = sadd.s32 1, %s1067
                  %p1073 = scmp.ge.s32.totalorder %s1072, %s1055
                  %s1074 = scalar_select %p1073, 0, %s1072
                  %s1075 = smul.u32 %s1074, 4
                  %s1076 = smul.u32 %s1074, 4
                  %s1077 = scalar_lea.vmem %s1058, %s1075 [#allocation2]
                  %s1078 = scalar_lea.vmem %s1060, %s1076
                $region78: #{net_forward.3} parent=65 // loop_footer
                  %s1064 = sadd.s32 %s1062, 1
                $region79: #{net_forward.3} parent=65 // loop_footer_branch
                  %1061 = sbr.rel target = $region75
                $region80: #{net_forward.3} parent=65 // loop_exit
                  _
              $region66: #{net_forward.3} parent=43 // pred_fallthru
                _
            $region44: #{net_forward.3} parent=39 // pred_fallthru
              _
            // Predicated region
            $region45: #{net_forward.3} parent=39 // pred_check
              _
            $region46: #{net_forward.3} parent=39 // pred_check_branch
              %886 = sbr.rel (0) target = $region48
            $region47: #{net_forward.3} parent=39 // pred_region
              %s888 = ssub.s32 16, 1
              %s889 = sdiv.u32.pop %s875, 25
              %s890 = srem.u32.pop %s875, 25
              // While loop
              $region49: #{net_forward.3} parent=47 // loop_pre_header
                _
              $region50: #{net_forward.3} parent=47 // loop_header
                %s892 = sphi 0, %s894
                %p893 = scmp.ge.s32.totalorder %s892, %s889
                %s897 = sphi 0, %s952
                %s898 = sphi %s868, %s955
                %s899 = sphi %s879, %s956
              $region51: #{net_forward.3} parent=47 // loop_header_branch
                %896 = sbr.rel (%p893) target = $region55
              $region52: #{net_forward.3} parent=47 // loop_body
                %v900 = vld [vmem:[%s898] sm:%s888]
                %901 = vst [vmem:[%s899] sm:%s888] %v900
                %v902 = vld [vmem:[%s898 + $0x4] sm:%s888]
                %903 = vst [vmem:[%s899 + $0x4] sm:%s888] %v902
                %v904 = vld [vmem:[%s898 + $0x8] sm:%s888]
                %905 = vst [vmem:[%s899 + $0x8] sm:%s888] %v904
                %v906 = vld [vmem:[%s898 + $0xc] sm:%s888]
                %907 = vst [vmem:[%s899 + $0xc] sm:%s888] %v906
                %v908 = vld [vmem:[%s898 + $0x10] sm:%s888]
                %909 = vst [vmem:[%s899 + $0x10] sm:%s888] %v908
                %v910 = vld [vmem:[%s898 + $0x14] sm:%s888]
                %911 = vst [vmem:[%s899 + $0x14] sm:%s888] %v910
                %v912 = vld [vmem:[%s898 + $0x18] sm:%s888]
                %913 = vst [vmem:[%s899 + $0x18] sm:%s888] %v912
                %v914 = vld [vmem:[%s898 + $0x1c] sm:%s888]
                %915 = vst [vmem:[%s899 + $0x1c] sm:%s888] %v914
                %v916 = vld [vmem:[%s898 + $0x20] sm:%s888]
                %917 = vst [vmem:[%s899 + $0x20] sm:%s888] %v916
                %v918 = vld [vmem:[%s898 + $0x24] sm:%s888]
                %919 = vst [vmem:[%s899 + $0x24] sm:%s888] %v918
                %v920 = vld [vmem:[%s898 + $0x28] sm:%s888]
                %921 = vst [vmem:[%s899 + $0x28] sm:%s888] %v920
                %v922 = vld [vmem:[%s898 + $0x2c] sm:%s888]
                %923 = vst [vmem:[%s899 + $0x2c] sm:%s888] %v922
                %v924 = vld [vmem:[%s898 + $0x30] sm:%s888]
                %925 = vst [vmem:[%s899 + $0x30] sm:%s888] %v924
                %v926 = vld [vmem:[%s898 + $0x34] sm:%s888]
                %927 = vst [vmem:[%s899 + $0x34] sm:%s888] %v926
                %v928 = vld [vmem:[%s898 + $0x38] sm:%s888]
                %929 = vst [vmem:[%s899 + $0x38] sm:%s888] %v928
                %v930 = vld [vmem:[%s898 + $0x3c] sm:%s888]
                %931 = vst [vmem:[%s899 + $0x3c] sm:%s888] %v930
                %v932 = vld [vmem:[%s898 + $0x40] sm:%s888]
                %933 = vst [vmem:[%s899 + $0x40] sm:%s888] %v932
                %v934 = vld [vmem:[%s898 + $0x44] sm:%s888]
                %935 = vst [vmem:[%s899 + $0x44] sm:%s888] %v934
                %v936 = vld [vmem:[%s898 + $0x48] sm:%s888]
                %937 = vst [vmem:[%s899 + $0x48] sm:%s888] %v936
                %v938 = vld [vmem:[%s898 + $0x4c] sm:%s888]
                %939 = vst [vmem:[%s899 + $0x4c] sm:%s888] %v938
                %v940 = vld [vmem:[%s898 + $0x50] sm:%s888]
                %941 = vst [vmem:[%s899 + $0x50] sm:%s888] %v940
                %v942 = vld [vmem:[%s898 + $0x54] sm:%s888]
                %943 = vst [vmem:[%s899 + $0x54] sm:%s888] %v942
                %v944 = vld [vmem:[%s898 + $0x58] sm:%s888]
                %945 = vst [vmem:[%s899 + $0x58] sm:%s888] %v944
                %v946 = vld [vmem:[%s898 + $0x5c] sm:%s888]
                %947 = vst [vmem:[%s899 + $0x5c] sm:%s888] %v946
                %v948 = vld [vmem:[%s898 + $0x60] sm:%s888]
                %949 = vst [vmem:[%s899 + $0x60] sm:%s888] %v948
                %s950 = sadd.s32 1, %s897
                %p951 = scmp.ge.s32.totalorder %s950, %s889
                %s952 = scalar_select %p951, 0, %s950
                %s953 = smul.u32 %s952, 100
                %s954 = smul.u32 %s952, 100
                %s955 = scalar_lea.vmem %s868, %s953 [#allocation2]
                %s956 = scalar_lea.vmem %s879, %s954
              $region53: #{net_forward.3} parent=47 // loop_footer
                %s894 = sadd.s32 %s892, 1
              $region54: #{net_forward.3} parent=47 // loop_footer_branch
                %891 = sbr.rel target = $region50
              $region55: #{net_forward.3} parent=47 // loop_exit
                _
              %s957 = sdiv.u32.pop %s875, 25
              %s958 = srem.u32.pop %s875, 25
              %s959 = smul.u32 %s957, 25
              %s960 = smul.u32 4, %s959
              %s961 = scalar_lea.vmem %s868, %s960 [#allocation2]
              %s962 = smul.u32 4, %s959
              %s963 = scalar_lea.vmem %s879, %s962
              // While loop
              $region56: #{net_forward.3} parent=47 // loop_pre_header
                _
              $region57: #{net_forward.3} parent=47 // loop_header
                %s965 = sphi 0, %s967
                %p966 = scmp.ge.s32.totalorder %s965, %s958
                %s970 = sphi 0, %s977
                %s971 = sphi %s961, %s980
                %s972 = sphi %s963, %s981
              $region58: #{net_forward.3} parent=47 // loop_header_branch
                %969 = sbr.rel (%p966) target = $region62
              $region59: #{net_forward.3} parent=47 // loop_body
                %v973 = vld [vmem:[%s971] sm:%s888]
                %974 = vst [vmem:[%s972] sm:%s888] %v973
                %s975 = sadd.s32 1, %s970
                %p976 = scmp.ge.s32.totalorder %s975, %s958
                %s977 = scalar_select %p976, 0, %s975
                %s978 = smul.u32 %s977, 4
                %s979 = smul.u32 %s977, 4
                %s980 = scalar_lea.vmem %s961, %s978 [#allocation2]
                %s981 = scalar_lea.vmem %s963, %s979
              $region60: #{net_forward.3} parent=47 // loop_footer
                %s967 = sadd.s32 %s965, 1
              $region61: #{net_forward.3} parent=47 // loop_footer_branch
                %964 = sbr.rel target = $region57
              $region62: #{net_forward.3} parent=47 // loop_exit
                _
            $region48: #{net_forward.3} parent=39 // pred_fallthru
              _
          $region40: #{net_forward.3} parent=35 // pred_fallthru
            _
          %1079 = vnop
        $region36: #{net_forward.3} parent=31 // pred_fallthru
          _
      $region32: #{net_forward.3} parent=5 // pred_fallthru
        _
      %p1080 = scmp.le.s32.totalorder 2, %s9
      // Predicated region
      $region81: #{net_forward.3} parent=5 // pred_check
        %p1081 = pneg %p1080
      $region82: #{net_forward.3} parent=5 // pred_check_branch
        %1083 = sbr.rel (%p1081) target = $region84
      $region83: #{net_forward.3} parent=5 // pred_region
        %s1084 = ssub.s32 %s9, 2
        // Predicated region
        $region85: #{net_forward.3} parent=83 // pred_check
          %p1085 = pneg %p106
        $region86: #{net_forward.3} parent=83 // pred_check_branch
          %1087 = sbr.rel (%p1085) target = $region88
        $region87: #{net_forward.3} parent=83 // pred_region
          %s1088 = sand.u32 %s91, 1
          %s1089 = sand.u32 %s91, 1
          %s1090 = smul.addr %s1089, 100
          %s1091 = scalar_lea.vmem [#allocation2], %s1090
        $region88: #{net_forward.3} parent=83 // pred_fallthru
          _
      $region84: #{net_forward.3} parent=5 // pred_fallthru
        _
    $region6: #{net_forward.3} parent=1 // loop_footer
      %s13 = sadd.s32 1, %s9
    $region7: #{net_forward.3} parent=1 // loop_footer_branch
      %8 = sbr.rel target = $region3
    $region8: #{net_forward.3} parent=1 // loop_exit
      _

// kernel: net_forward.4
$region0: #{net_forward.4}
  #allocation0 [shape = 'u32[]', space=smem, size = 0x4, offset = 0x4, fixed_abs, tag = 'smem constant byte address 0x4 - core index']
  #allocation1 [shape = 'u32[72,128]{1,0:T(1,128)}', space=vmem, size = 0x9000, scoped, tag = 'internal scratch']
  %s0 = inlined_call_operand.vmem [shape: bf16[50,216], index: 0, kind: input, shape index: {}]
  %s1 = inlined_call_operand.vmem [shape: bf16[216,512], index: 1, kind: input, shape index: {}]
  %s2 = inlined_call_operand.vmem [shape: f32[1,128], index: 2, kind: input, shape index: {}]
  %s3 = inlined_call_operand.vmem [shape: bf16[50,128], index: 3, kind: output, shape index: {}]
  %s4 = sld [smem:[#allocation0]]
  $region89: #{net_forward.4} parent=0
    _
  %s6 = ssub.s32 1, %s4
  %s7 = scalar_select 0, %s6, %s4
  $region1: #{net_forward.4} parent=0
    #allocation2 [shape = 'u8[16384]{0}', space=vmem, size = 0x4000, scoped, tag = 'output window, operand 0']
    loop: start=0, step=1, limit=4
    $region2: #{net_forward.4} parent=1 // loop_pre_header
      _
    $region3: #{net_forward.4} parent=1 // loop_header
      %s9 = sphi 0, %s13
      %p10 = scmp.ge.s32.totalorder %s9, 4
      %s19 = sphi 0, %s21
      %s22 = sphi 0, %s19
      %s23 = sphi 0, %s22
      %s39 = sphi 0, %s23
      %s43 = sphi 0, %s43
      %s45 = sphi 0, %s43
      %s46 = sphi 0, %s45
      %s60 = sphi 0, %s46
      %s64 = sphi 0, %s64
      %s66 = sphi 0, %s64
      %s67 = sphi 0, %s66
      %s81 = sphi 0, %s67
      %s87 = sphi 0, %s89
      %s90 = sphi 0, %s87
      %s91 = sphi 0, %s90
      %s107 = sphi 0, %s91
    $region4: #{net_forward.4} parent=1 // loop_header_branch
      %12 = sbr.rel (%p10) target = $region8
    $region5: #{net_forward.4} parent=1 // loop_body
      %s14 = ssub.s32 %s9, 1
      %s15 = ssub.s32 %s9, 2
      %s16 = sadd.s32 %s9, 1
      %s17 = ssub.s32 %s9, %s16
      %p18 = scmp.eq.s32.totalorder %s17, 0
      %s20 = sadd.s32 %s19, 1
      %s21 = scalar_select %p18, %s19, %s20
      %p24 = pneg %p18
      %p25 = scmp.eq.s32.totalorder %s9, 1
      %p26 = por %p24, %p25
      %p27 = scmp.ne.s32.totalorder %s19, %s22
      %p28 = scmp.eq.s32.totalorder %s9, 0
      %p29 = por %p27, %p28
      %p30 = scmp.ne.s32.totalorder %s19, %s22
      %p31 = scmp.eq.s32.totalorder %s14, 1
      %p32 = por %p30, %p31
      %p33 = scmp.ne.s32.totalorder %s22, %s23
      %p34 = scmp.eq.s32.totalorder %s14, 0
      %p35 = por %p33, %p34
      %p36 = scmp.ne.s32.totalorder %s22, %s23
      %p37 = scmp.eq.s32.totalorder %s15, 1
      %p38 = por %p36, %p37
      %p40 = scmp.ne.s32.totalorder %s23, %s39
      %p41 = scmp.eq.s32.totalorder %s15, 0
      %p42 = por %p40, %p41
      %s44 = sadd.s32 %s43, 1
      %p47 = scmp.eq.s32.totalorder %s9, 1
      %p48 = scmp.ne.s32.totalorder %s43, %s45
      %p49 = scmp.eq.s32.totalorder %s9, 0
      %p50 = por %p48, %p49
      %p51 = scmp.ne.s32.totalorder %s43, %s45
      %p52 = scmp.eq.s32.totalorder %s14, 1
      %p53 = por %p51, %p52
      %p54 = scmp.ne.s32.totalorder %s45, %s46
      %p55 = scmp.eq.s32.totalorder %s14, 0
      %p56 = por %p54, %p55
      %p57 = scmp.ne.s32.totalorder %s45, %s46
      %p58 = scmp.eq.s32.totalorder %s15, 1
      %p59 = por %p57, %p58
      %p61 = scmp.ne.s32.totalorder %s46, %s60
      %p62 = scmp.eq.s32.totalorder %s15, 0
      %p63 = por %p61, %p62
      %s65 = sadd.s32 %s64, 1
      %p68 = scmp.eq.s32.totalorder %s9, 1
      %p69 = scmp.ne.s32.totalorder %s64, %s66
      %p70 = scmp.eq.s32.totalorder %s9, 0
      %p71 = por %p69, %p70
      %p72 = scmp.ne.s32.totalorder %s64, %s66
      %p73 = scmp.eq.s32.totalorder %s14, 1
      %p74 = por %p72, %p73
      %p75 = scmp.ne.s32.totalorder %s66, %s67
      %p76 = scmp.eq.s32.totalorder %s14, 0
      %p77 = por %p75, %p76
      %p78 = scmp.ne.s32.totalorder %s66, %s67
      %p79 = scmp.eq.s32.totalorder %s15, 1
      %p80 = por %p78, %p79
      %p82 = scmp.ne.s32.totalorder %s67, %s81
      %p83 = scmp.eq.s32.totalorder %s15, 0
      %p84 = por %p82, %p83
      %s85 = ssub.s32 %s9, %s16
      %p86 = scmp.eq.s32.totalorder %s85, 0
      %s88 = sadd.s32 %s87, 1
      %s89 = scalar_select %p86, %s87, %s88
      %p92 = pneg %p86
      %p93 = scmp.eq.s32.totalorder %s9, 1
      %p94 = por %p92, %p93
      %p95 = scmp.ne.s32.totalorder %s87, %s90
      %p96 = scmp.eq.s32.totalorder %s9, 0
      %p97 = por %p95, %p96
      %p98 = scmp.ne.s32.totalorder %s87, %s90
      %p99 = scmp.eq.s32.totalorder %s14, 1
      %p100 = por %p98, %p99
      %p101 = scmp.ne.s32.totalorder %s90, %s91
      %p102 = scmp.eq.s32.totalorder %s14, 0
      %p103 = por %p101, %p102
      %p104 = scmp.ne.s32.totalorder %s90, %s91
      %p105 = scmp.eq.s32.totalorder %s15, 1
      %p106 = por %p104, %p105
      %p108 = scmp.ne.s32.totalorder %s91, %s107
      %p109 = scmp.eq.s32.totalorder %s15, 0
      %p110 = por %p108, %p109
      %p111 = scmp.le.s32.totalorder 1, %s9
      %p112 = scmp.lt.s32.totalorder %s9, 3
      %p113 = pnand %p111, %p112
      %p114 = pneg %p113
      // Predicated region
      $region9: #{net_forward.4} parent=5 // pred_check
        _
      $region10: #{net_forward.4} parent=5 // pred_check_branch
        %116 = sbr.rel (%p113) target = $region12
      $region11: #{net_forward.4} parent=5 // pred_region
        %s117 = ssub.s32 %s9, 1
        // Predicated region
        $region13: #{net_forward.4} parent=11 // pred_check
          %p118 = pneg %p56
        $region14: #{net_forward.4} parent=11 // pred_check_branch
          %120 = sbr.rel (%p118) target = $region16
        $region15: #{net_forward.4} parent=11 // pred_region
          _
        $region16: #{net_forward.4} parent=11 // pred_fallthru
          _
        // Predicated region
        $region17: #{net_forward.4} parent=11 // pred_check
          %p121 = pneg %p77
        $region18: #{net_forward.4} parent=11 // pred_check_branch
          %123 = sbr.rel (%p121) target = $region20
        $region19: #{net_forward.4} parent=11 // pred_region
          _
        $region20: #{net_forward.4} parent=11 // pred_fallthru
          _
      $region12: #{net_forward.4} parent=5 // pred_fallthru
        _
      %p124 = scmp.lt.s32.totalorder %s9, 2
      // Predicated region
      $region21: #{net_forward.4} parent=5 // pred_check
        %p125 = pneg %p124
      $region22: #{net_forward.4} parent=5 // pred_check_branch
        %127 = sbr.rel (%p125) target = $region24
      $region23: #{net_forward.4} parent=5 // pred_region
        // Predicated region
        $region25: #{net_forward.4} parent=23 // pred_check
          %p128 = pneg %p29
        $region26: #{net_forward.4} parent=23 // pred_check_branch
          %130 = sbr.rel (%p128) target = $region28
        $region27: #{net_forward.4} parent=23 // pred_region
          %s131 = smul.u32 4, %s9
          %s132 = ssub.s32 7, %s131
          %p133 = scmp.lt.s32.totalorder %s132, 4
          %s134 = scalar_select %p133, %s132, 4
          %s135 = smul.u32 4, %s134
          %s136 = smul.u32 %s135, 2
          %p137 = scmp.lt.s32.totalorder %s131, 6
          %s138 = scalar_select %p137, %s131, 6
          %s139 = smul.addr %s138, 2
          %s140 = smul.addr %s139, 4
          %s141 = scalar_lea.vmem %s0, %s140
          %s142 = smul.u32 4, %s9
          %s143 = ssub.s32 7, %s142
          %p144 = scmp.lt.s32.totalorder %s143, 4
          %s145 = scalar_select %p144, %s143, 4
          %s146 = smul.u32 4, %s145
          %s147 = smul.u32 %s146, 2
        $region28: #{net_forward.4} parent=23 // pred_fallthru
          _
      $region24: #{net_forward.4} parent=5 // pred_fallthru
        _
      %p148 = scmp.le.s32.totalorder 1, %s9
      %p149 = scmp.lt.s32.totalorder %s9, 3
      %p150 = pnand %p148, %p149
      %p151 = pneg %p150
      // Predicated region
      $region29: #{net_forward.4} parent=5 // pred_check
        _
      $region30: #{net_forward.4} parent=5 // pred_check_branch
        %153 = sbr.rel (%p150) target = $region32
      $region31: #{net_forward.4} parent=5 // pred_region
        %s154 = ssub.s32 %s9, 1
        %s155 = smul.u32 4, %s14
        %s156 = ssub.s32 7, %s155
        %p157 = scmp.lt.s32.totalorder %s156, 4
        %s158 = scalar_select %p157, %s156, 4
        %s159 = smul.u32 4, %s158
        %s160 = smul.u32 %s159, 2
        %p161 = scmp.lt.s32.totalorder %s155, 6
        %s162 = scalar_select %p161, %s155, 6
        %s163 = smul.addr %s162, 2
        %s164 = smul.addr %s163, 4
        %s165 = scalar_lea.vmem %s0, %s164
        %p166 = pneg %p35
        %p167 = pneg %p32
        %p168 = pneg %p56
        %p169 = pneg %p53
        %p170 = pneg %p77
        %p171 = pneg %p74
        %p172 = pneg %p103
        %p173 = pneg %p100
        %s174 = sand.u32 %s90, 1
        %s175 = sand.u32 %s90, 1
        %s176 = smul.addr %s175, 16
        %s177 = scalar_lea.vmem [#allocation2], %s176
        %s178 = smul.u32 4, %s14
        %s179 = ssub.s32 7, %s178
        %p180 = scmp.lt.s32.totalorder %s179, 4
        %s181 = scalar_select %p180, %s179, 4
        %s182 = smul.u32 4, %s181
        %s183 = smul.u32 %s182, 2
        %p184 = scmp.lt.s32.totalorder %s178, 6
        %s185 = scalar_select %p184, %s178, 6
        %s186 = smul.addr %s185, 2
        %s187 = smul.addr %s186, 4
        %s188 = scalar_lea.vmem %s0, %s187
        %s189 = smul.u32 4, %s14
        %s190 = ssub.s32 7, %s189
        %p191 = scmp.lt.s32.totalorder %s190, 4
        %s192 = scalar_select %p191, %s190, 4
        %s193 = smul.u32 4, %s192
        %s194 = smul.u32 %s193, 2
        %s195 = smul.u32 4, %s14
        %s196 = ssub.s32 7, %s195
        %p197 = scmp.lt.s32.totalorder %s196, 4
        %s198 = scalar_select %p197, %s196, 4
        %s199 = smul.u32 4, %s198
        %v201 = vld [vmem:[%s188] sm:$0xff]
        %v202 = vld [vmem:[%s188 + $0x8] sm:$0xff]
        %v203 = vld [vmem:[%s188 + $0x10] sm:$0xff]
        %v204 = vld [vmem:[%s188 + $0x18] sm:$0xff]
        %v205 = vld [vmem:[%s1] sm:$0xff]
        %v206 = vld [vmem:[%s1 + $0x8] sm:$0xff]
        %v207 = vld [vmem:[%s1 + $0x10] sm:$0xff]
        %v208 = vld [vmem:[%s1 + $0x18] sm:$0xff]
        %v209 = vld [vmem:[%s1 + $0x20] sm:$0xff]
        %v210 = vld [vmem:[%s1 + $0x28] sm:$0xff]
        %v211 = vld [vmem:[%s1 + $0x30] sm:$0xff]
        %v212 = vld [vmem:[%s1 + $0x38] sm:$0xff]
        %v213 = vld [vmem:[%s1 + $0x40] sm:$0xff]
        %v214 = vld [vmem:[%s1 + $0x48] sm:$0xff]
        %v215 = vld [vmem:[%s1 + $0x50] sm:$0xff]
        %v216 = vld [vmem:[%s1 + $0x58] sm:$0xff]
        %v217 = vld [vmem:[%s1 + $0x60] sm:$0xff]
        %v218 = vld [vmem:[%s1 + $0x68] sm:$0xff]
        %v219 = vld [vmem:[%s1 + $0x70] sm:$0xff]
        %v220 = vld [vmem:[%s1 + $0x78] sm:$0xff]
        %v221 = vld [vmem:[%s1 + $0x80] sm:$0xff]
        %v222 = vld [vmem:[%s1 + $0x88] sm:$0xff]
        %v223 = vld [vmem:[%s1 + $0x90] sm:$0xff]
        %v224 = vld [vmem:[%s1 + $0x98] sm:$0xff]
        %v225 = vld [vmem:[%s1 + $0xa0] sm:$0xff]
        %v226 = vld [vmem:[%s1 + $0xa8] sm:$0xff]
        %v227 = vld [vmem:[%s1 + $0xb0] sm:$0xff]
        %v228 = vld [vmem:[%s1 + $0xb8] sm:$0xff]
        %v229 = vld [vmem:[%s1 + $0xc0] sm:$0xff]
        %v230 = vld [vmem:[%s1 + $0xc8] sm:$0xff]
        %v231 = vld [vmem:[%s1 + $0xd0] sm:$0xff]
        %v232 = vld [vmem:[%s1 + $0xd8] sm:$0xff]
        %v233 = vld [vmem:[%s1 + $0xe0] sm:$0xff]
        %v234 = vld [vmem:[%s1 + $0xe8] sm:$0xff]
        %v235 = vld [vmem:[%s1 + $0xf0] sm:$0xff]
        %v236 = vld [vmem:[%s1 + $0xf8] sm:$0xff]
        %v237 = vld [vmem:[%s1 + $0x100] sm:$0xff]
        %v238 = vld [vmem:[%s1 + $0x108] sm:$0xff]
        %v239 = vld [vmem:[%s1 + $0x110] sm:$0xff]
        %v240 = vld [vmem:[%s1 + $0x118] sm:$0xff]
        %v241 = vld [vmem:[%s1 + $0x120] sm:$0xff]
        %v242 = vld [vmem:[%s1 + $0x128] sm:$0xff]
        %v243 = vld [vmem:[%s1 + $0x130] sm:$0xff]
        %v244 = vld [vmem:[%s1 + $0x138] sm:$0xff]
        %v245 = vld [vmem:[%s1 + $0x140] sm:$0xff]
        %v246 = vld [vmem:[%s1 + $0x148] sm:$0xff]
        %v247 = vld [vmem:[%s1 + $0x150] sm:$0xff]
        %v248 = vld [vmem:[%s1 + $0x158] sm:$0xff]
        %v249 = vld [vmem:[%s1 + $0x160] sm:$0xff]
        %v250 = vld [vmem:[%s1 + $0x168] sm:$0xff]
        %v251 = vld [vmem:[%s1 + $0x170] sm:$0xff]
        %v252 = vld [vmem:[%s1 + $0x178] sm:$0xff]
        %v253 = vld [vmem:[%s1 + $0x180] sm:$0xff]
        %v254 = vld [vmem:[%s1 + $0x188] sm:$0xff]
        %v255 = vld [vmem:[%s1 + $0x190] sm:$0xff]
        %v256 = vld [vmem:[%s1 + $0x198] sm:$0xff]
        %v257 = vld [vmem:[%s1 + $0x1a0] sm:$0xff]
        %v258 = vld [vmem:[%s1 + $0x1a8] sm:$0xff]
        %v263 = vunpack.c.l.b16 %v201
        %v264 = vunpack.c.h.b16 %v201
        %v265 = vunpack.c.l.b16 %v202
        %v266 = vunpack.c.h.b16 %v202
        %v267 = vunpack.c.l.b16 %v203
        %v268 = vunpack.c.h.b16 %v203
        %v269 = vunpack.c.l.b16 %v204
        %v270 = vunpack.c.h.b16 %v204
        %v271 = vpack.c.b16 %v265, %v263
        %v272 = vpack.c.b16 %v266, %v264
        %v273 = vpack.c.b16 %v269, %v267
        %v274 = vpack.c.b16 %v270, %v268
        %v331 = vunpack.c.l.b16 %v205
        %v332 = vunpack.c.h.b16 %v205
        %v333 = vunpack.c.l.b16 %v206
        %v334 = vunpack.c.h.b16 %v206
        %v335 = vunpack.c.l.b16 %v207
        %v336 = vunpack.c.h.b16 %v207
        %v337 = vunpack.c.l.b16 %v208
        %v338 = vunpack.c.h.b16 %v208
        %v339 = vunpack.c.l.b16 %v209
        %v340 = vunpack.c.h.b16 %v209
        %v341 = vunpack.c.l.b16 %v210
        %v342 = vunpack.c.h.b16 %v210
        %v343 = vunpack.c.l.b16 %v211
        %v344 = vunpack.c.h.b16 %v211
        %v345 = vunpack.c.l.b16 %v212
        %v346 = vunpack.c.h.b16 %v212
        %v347 = vunpack.c.l.b16 %v213
        %v348 = vunpack.c.h.b16 %v213
        %v349 = vunpack.c.l.b16 %v214
        %v350 = vunpack.c.h.b16 %v214
        %v351 = vunpack.c.l.b16 %v215
        %v352 = vunpack.c.h.b16 %v215
        %v353 = vunpack.c.l.b16 %v216
        %v354 = vunpack.c.h.b16 %v216
        %v355 = vunpack.c.l.b16 %v217
        %v356 = vunpack.c.h.b16 %v217
        %v357 = vunpack.c.l.b16 %v218
        %v358 = vunpack.c.h.b16 %v218
        %v359 = vunpack.c.l.b16 %v219
        %v360 = vunpack.c.h.b16 %v219
        %v361 = vunpack.c.l.b16 %v220
        %v362 = vunpack.c.h.b16 %v220
        %v363 = vunpack.c.l.b16 %v221
        %v364 = vunpack.c.h.b16 %v221
        %v365 = vunpack.c.l.b16 %v222
        %v366 = vunpack.c.h.b16 %v222
        %v367 = vunpack.c.l.b16 %v223
        %v368 = vunpack.c.h.b16 %v223
        %v369 = vunpack.c.l.b16 %v224
        %v370 = vunpack.c.h.b16 %v224
        %v371 = vunpack.c.l.b16 %v225
        %v372 = vunpack.c.h.b16 %v225
        %v373 = vunpack.c.l.b16 %v226
        %v374 = vunpack.c.h.b16 %v226
        %v375 = vunpack.c.l.b16 %v227
        %v376 = vunpack.c.h.b16 %v227
        %v377 = vunpack.c.l.b16 %v228
        %v378 = vunpack.c.h.b16 %v228
        %v379 = vunpack.c.l.b16 %v229
        %v380 = vunpack.c.h.b16 %v229
        %v381 = vunpack.c.l.b16 %v230
        %v382 = vunpack.c.h.b16 %v230
        %v383 = vunpack.c.l.b16 %v231
        %v384 = vunpack.c.h.b16 %v231
        %v385 = vunpack.c.l.b16 %v232
        %v386 = vunpack.c.h.b16 %v232
        %v387 = vunpack.c.l.b16 %v233
        %v388 = vunpack.c.h.b16 %v233
        %v389 = vunpack.c.l.b16 %v234
        %v390 = vunpack.c.h.b16 %v234
        %v391 = vunpack.c.l.b16 %v235
        %v392 = vunpack.c.h.b16 %v235
        %v393 = vunpack.c.l.b16 %v236
        %v394 = vunpack.c.h.b16 %v236
        %v395 = vunpack.c.l.b16 %v237
        %v396 = vunpack.c.h.b16 %v237
        %v397 = vunpack.c.l.b16 %v238
        %v398 = vunpack.c.h.b16 %v238
        %v399 = vunpack.c.l.b16 %v239
        %v400 = vunpack.c.h.b16 %v239
        %v401 = vunpack.c.l.b16 %v240
        %v402 = vunpack.c.h.b16 %v240
        %v403 = vunpack.c.l.b16 %v241
        %v404 = vunpack.c.h.b16 %v241
        %v405 = vunpack.c.l.b16 %v242
        %v406 = vunpack.c.h.b16 %v242
        %v407 = vunpack.c.l.b16 %v243
        %v408 = vunpack.c.h.b16 %v243
        %v409 = vunpack.c.l.b16 %v244
        %v410 = vunpack.c.h.b16 %v244
        %v411 = vunpack.c.l.b16 %v245
        %v412 = vunpack.c.h.b16 %v245
        %v413 = vunpack.c.l.b16 %v246
        %v414 = vunpack.c.h.b16 %v246
        %v415 = vunpack.c.l.b16 %v247
        %v416 = vunpack.c.h.b16 %v247
        %v417 = vunpack.c.l.b16 %v248
        %v418 = vunpack.c.h.b16 %v248
        %v419 = vunpack.c.l.b16 %v249
        %v420 = vunpack.c.h.b16 %v249
        %v421 = vunpack.c.l.b16 %v250
        %v422 = vunpack.c.h.b16 %v250
        %v423 = vunpack.c.l.b16 %v251
        %v424 = vunpack.c.h.b16 %v251
        %v425 = vunpack.c.l.b16 %v252
        %v426 = vunpack.c.h.b16 %v252
        %v427 = vunpack.c.l.b16 %v253
        %v428 = vunpack.c.h.b16 %v253
        %v429 = vunpack.c.l.b16 %v254
        %v430 = vunpack.c.h.b16 %v254
        %v431 = vunpack.c.l.b16 %v255
        %v432 = vunpack.c.h.b16 %v255
        %v433 = vunpack.c.l.b16 %v256
        %v434 = vunpack.c.h.b16 %v256
        %v435 = vunpack.c.l.b16 %v257
        %v436 = vunpack.c.h.b16 %v257
        %v437 = vunpack.c.l.b16 %v258
        %v438 = vunpack.c.h.b16 %v258
        %v439 = vpack.c.b16 %v335, %v331
        %v440 = vpack.c.b16 %v336, %v332
        %v441 = vpack.c.b16 %v337, %v333
        %v442 = vpack.c.b16 %v338, %v334
        %v443 = vpack.c.b16 %v343, %v339
        %v444 = vpack.c.b16 %v344, %v340
        %v445 = vpack.c.b16 %v345, %v341
        %v446 = vpack.c.b16 %v346, %v342
        %v447 = vpack.c.b16 %v351, %v347
        %v448 = vpack.c.b16 %v352, %v348
        %v449 = vpack.c.b16 %v353, %v349
        %v450 = vpack.c.b16 %v354, %v350
        %v451 = vpack.c.b16 %v359, %v355
        %v452 = vpack.c.b16 %v360, %v356
        %v453 = vpack.c.b16 %v361, %v357
        %v454 = vpack.c.b16 %v362, %v358
        %v455 = vpack.c.b16 %v367, %v363
        %v456 = vpack.c.b16 %v368, %v364
        %v457 = vpack.c.b16 %v369, %v365
        %v458 = vpack.c.b16 %v370, %v366
        %v459 = vpack.c.b16 %v375, %v371
        %v460 = vpack.c.b16 %v376, %v372
        %v461 = vpack.c.b16 %v377, %v373
        %v462 = vpack.c.b16 %v378, %v374
        %v463 = vpack.c.b16 %v383, %v379
        %v464 = vpack.c.b16 %v384, %v380
        %v465 = vpack.c.b16 %v385, %v381
        %v466 = vpack.c.b16 %v386, %v382
        %v467 = vpack.c.b16 %v391, %v387
        %v468 = vpack.c.b16 %v392, %v388
        %v469 = vpack.c.b16 %v393, %v389
        %v470 = vpack.c.b16 %v394, %v390
        %v471 = vpack.c.b16 %v399, %v395
        %v472 = vpack.c.b16 %v400, %v396
        %v473 = vpack.c.b16 %v401, %v397
        %v474 = vpack.c.b16 %v402, %v398
        %v475 = vpack.c.b16 %v407, %v403
        %v476 = vpack.c.b16 %v408, %v404
        %v477 = vpack.c.b16 %v409, %v405
        %v478 = vpack.c.b16 %v410, %v406
        %v479 = vpack.c.b16 %v415, %v411
        %v480 = vpack.c.b16 %v416, %v412
        %v481 = vpack.c.b16 %v417, %v413
        %v482 = vpack.c.b16 %v418, %v414
        %v483 = vpack.c.b16 %v423, %v419
        %v484 = vpack.c.b16 %v424, %v420
        %v485 = vpack.c.b16 %v425, %v421
        %v486 = vpack.c.b16 %v426, %v422
        %v487 = vpack.c.b16 %v431, %v427
        %v488 = vpack.c.b16 %v432, %v428
        %v489 = vpack.c.b16 %v433, %v429
        %v490 = vpack.c.b16 %v434, %v430
        %v491 = vpack.c.b16 %v435, %v435
        %v492 = vpack.c.b16 %v436, %v436
        %v493 = vpack.c.b16 %v437, %v437
        %v494 = vpack.c.b16 %v438, %v438
        %vm547 = vcmask 719872
        %v549 = vsel %vm547, %v272, 0
        %v552 = vsel %vm547, %v274, 0
        %vm554 = vcmask 1043456
        %v556 = vsel %vm554, %v491, 0
        %v559 = vsel %vm554, %v492, 0
        %v562 = vsel %vm554, %v493, 0
        %v565 = vsel %vm554, %v494, 0
        %567 = vmatpush.bf16.msra.mxu0 %v467
        %568 = vmatpush.bf16.msra.mxu0 %v463
        %569 = vmatpush.bf16.msra.mxu0 %v459
        %570 = vmatpush.bf16.msra.mxu0 %v455
        %571 = vmatpush.bf16.msra.mxu0 %v451
        %572 = vmatpush.bf16.msra.mxu0 %v447
        %573 = vmatpush.bf16.msra.mxu0 %v443
        %574 = vmatpush.bf16.msra.mxu0 %v439
        %575 = vmatmul.bf16.gmra.mxu0 %v271
        %v576 = vpop.f32.mrf.mxu0
        %v577 = vadd.f32 0.0, %v576
        %v578 = vpop.f32.mrf.mxu0
        %v579 = vadd.f32 0.0, %v578
        %580 = vmatmul.bf16.gmra.mxu0 %v273
        %v581 = vpop.f32.mrf.mxu0
        %v582 = vadd.f32 0.0, %v581
        %v583 = vpop.f32.mrf.mxu0
        %v584 = vadd.f32 0.0, %v583
        %585 = vdwg.mxu0
        %586 = vmatpush.bf16.msra.mxu0 0
        %587 = vmatpush.bf16.msra.mxu0 0
        %588 = vmatpush.bf16.msra.mxu0 %v556
        %589 = vmatpush.bf16.msra.mxu0 %v487
        %590 = vmatpush.bf16.msra.mxu0 %v483
        %591 = vmatpush.bf16.msra.mxu0 %v479
        %592 = vmatpush.bf16.msra.mxu0 %v475
        %593 = vmatpush.bf16.msra.mxu0 %v471
        %594 = vmatmul.bf16.gmra.mxu0 %v549
        %v595 = vpop.f32.mrf.mxu0
        %v596 = vadd.f32 %v577, %v595
        %v597 = vpop.f32.mrf.mxu0
        %v598 = vadd.f32 %v579, %v597
        %599 = vmatmul.bf16.gmra.mxu0 %v552
        %v600 = vpop.f32.mrf.mxu0
        %v601 = vadd.f32 %v582, %v600
        %v602 = vpop.f32.mrf.mxu0
        %v603 = vadd.f32 %v584, %v602
        %604 = vdwg.mxu0
        %605 = vmatpush.bf16.msra.mxu0 %v468
        %606 = vmatpush.bf16.msra.mxu0 %v464
        %607 = vmatpush.bf16.msra.mxu0 %v460
        %608 = vmatpush.bf16.msra.mxu0 %v456
        %609 = vmatpush.bf16.msra.mxu0 %v452
        %610 = vmatpush.bf16.msra.mxu0 %v448
        %611 = vmatpush.bf16.msra.mxu0 %v444
        %612 = vmatpush.bf16.msra.mxu0 %v440
        %613 = vmatmul.bf16.gmra.mxu0 %v271
        %v614 = vpop.f32.mrf.mxu0
        %v615 = vadd.f32 0.0, %v614
        %v616 = vpop.f32.mrf.mxu0
        %v617 = vadd.f32 0.0, %v616
        %618 = vmatmul.bf16.gmra.mxu0 %v273
        %v619 = vpop.f32.mrf.mxu0
        %v620 = vadd.f32 0.0, %v619
        %v621 = vpop.f32.mrf.mxu0
        %v622 = vadd.f32 0.0, %v621
        %623 = vdwg.mxu0
        %624 = vmatpush.bf16.msra.mxu0 0
        %625 = vmatpush.bf16.msra.mxu0 0
        %626 = vmatpush.bf16.msra.mxu0 %v559
        %627 = vmatpush.bf16.msra.mxu0 %v488
        %628 = vmatpush.bf16.msra.mxu0 %v484
        %629 = vmatpush.bf16.msra.mxu0 %v480
        %630 = vmatpush.bf16.msra.mxu0 %v476
        %631 = vmatpush.bf16.msra.mxu0 %v472
        %632 = vmatmul.bf16.gmra.mxu0 %v549
        %v633 = vpop.f32.mrf.mxu0
        %v634 = vadd.f32 %v615, %v633
        %v635 = vpop.f32.mrf.mxu0
        %v636 = vadd.f32 %v617, %v635
        %637 = vmatmul.bf16.gmra.mxu0 %v552
        %v638 = vpop.f32.mrf.mxu0
        %v639 = vadd.f32 %v620, %v638
        %v640 = vpop.f32.mrf.mxu0
        %v641 = vadd.f32 %v622, %v640
        %642 = vdwg.mxu0
        %643 = vmatpush.bf16.msra.mxu0 %v469
        %644 = vmatpush.bf16.msra.mxu0 %v465
        %645 = vmatpush.bf16.msra.mxu0 %v461
        %646 = vmatpush.bf16.msra.mxu0 %v457
        %647 = vmatpush.bf16.msra.mxu0 %v453
        %648 = vmatpush.bf16.msra.mxu0 %v449
        %649 = vmatpush.bf16.msra.mxu0 %v445
        %650 = vmatpush.bf16.msra.mxu0 %v441
        %651 = vmatmul.bf16.gmra.mxu0 %v271
        %v652 = vpop.f32.mrf.mxu0
        %v653 = vadd.f32 0.0, %v652
        %v654 = vpop.f32.mrf.mxu0
        %v655 = vadd.f32 0.0, %v654
        %656 = vmatmul.bf16.gmra.mxu0 %v273
        %v657 = vpop.f32.mrf.mxu0
        %v658 = vadd.f32 0.0, %v657
        %v659 = vpop.f32.mrf.mxu0
        %v660 = vadd.f32 0.0, %v659
        %661 = vdwg.mxu0
        %662 = vmatpush.bf16.msra.mxu0 0
        %663 = vmatpush.bf16.msra.mxu0 0
        %664 = vmatpush.bf16.msra.mxu0 %v562
        %665 = vmatpush.bf16.msra.mxu0 %v489
        %666 = vmatpush.bf16.msra.mxu0 %v485
        %667 = vmatpush.bf16.msra.mxu0 %v481
        %668 = vmatpush.bf16.msra.mxu0 %v477
        %669 = vmatpush.bf16.msra.mxu0 %v473
        %670 = vmatmul.bf16.gmra.mxu0 %v549
        %v671 = vpop.f32.mrf.mxu0
        %v672 = vadd.f32 %v653, %v671
        %v673 = vpop.f32.mrf.mxu0
        %v674 = vadd.f32 %v655, %v673
        %675 = vmatmul.bf16.gmra.mxu0 %v552
        %v676 = vpop.f32.mrf.mxu0
        %v677 = vadd.f32 %v658, %v676
        %v678 = vpop.f32.mrf.mxu0
        %v679 = vadd.f32 %v660, %v678
        %680 = vdwg.mxu0
        %681 = vmatpush.bf16.msra.mxu0 %v470
        %682 = vmatpush.bf16.msra.mxu0 %v466
        %683 = vmatpush.bf16.msra.mxu0 %v462
        %684 = vmatpush.bf16.msra.mxu0 %v458
        %685 = vmatpush.bf16.msra.mxu0 %v454
        %686 = vmatpush.bf16.msra.mxu0 %v450
        %687 = vmatpush.bf16.msra.mxu0 %v446
        %688 = vmatpush.bf16.msra.mxu0 %v442
        %689 = vmatmul.bf16.gmra.mxu0 %v271
        %v690 = vpop.f32.mrf.mxu0
        %v691 = vadd.f32 0.0, %v690
        %v692 = vpop.f32.mrf.mxu0
        %v693 = vadd.f32 0.0, %v692
        %694 = vmatmul.bf16.gmra.mxu0 %v273
        %v695 = vpop.f32.mrf.mxu0
        %v696 = vadd.f32 0.0, %v695
        %v697 = vpop.f32.mrf.mxu0
        %v698 = vadd.f32 0.0, %v697
        %699 = vdwg.mxu0
        %700 = vmatpush.bf16.msra.mxu0 0
        %701 = vmatpush.bf16.msra.mxu0 0
        %702 = vmatpush.bf16.msra.mxu0 %v565
        %703 = vmatpush.bf16.msra.mxu0 %v490
        %704 = vmatpush.bf16.msra.mxu0 %v486
        %705 = vmatpush.bf16.msra.mxu0 %v482
        %706 = vmatpush.bf16.msra.mxu0 %v478
        %707 = vmatpush.bf16.msra.mxu0 %v474
        %708 = vmatmul.bf16.gmra.mxu0 %v549
        %v709 = vpop.f32.mrf.mxu0
        %v710 = vadd.f32 %v691, %v709
        %v711 = vpop.f32.mrf.mxu0
        %v712 = vadd.f32 %v693, %v711
        %713 = vmatmul.bf16.gmra.mxu0 %v552
        %v714 = vpop.f32.mrf.mxu0
        %v715 = vadd.f32 %v696, %v714
        %v716 = vpop.f32.mrf.mxu0
        %v717 = vadd.f32 %v698, %v716
        %718 = vdwg.mxu0
        %v719 = vmax.f32 %v596, %v634
        %v720 = vmax.f32 %v598, %v636
        %v721 = vmax.f32 %v601, %v639
        %v722 = vmax.f32 %v603, %v641
        %v723 = vmax.f32 %v672, %v710
        %v724 = vmax.f32 %v674, %v712
        %v725 = vmax.f32 %v677, %v715
        %v726 = vmax.f32 %v679, %v717
        %v727 = vmax.f32 %v719, %v723
        %v728 = vmax.f32 %v720, %v724
        %v729 = vmax.f32 %v721, %v725
        %v730 = vmax.f32 %v722, %v726
        %v731 = vld [vmem:[%s2] sm:$0x1]
        %v733 = vperm.slane %v731, 0
        %v735 = vadd.f32 %v727, %v733
        %v736 = vadd.f32 %v728, %v733
        %v737 = vadd.f32 %v729, %v733
        %v738 = vadd.f32 %v730, %v733
        %v739 = vmax.f32 %v735, 0.0
        %v740 = vmax.f32 %v736, 0.0
        %v741 = vmax.f32 %v737, 0.0
        %v742 = vmax.f32 %v738, 0.0
        %v743 = vpack.c.bf16 %v739, %v739
        %v744 = vpack.c.bf16 %v740, %v740
        %v745 = vpack.c.bf16 %v741, %v741
        %v746 = vpack.c.bf16 %v742, %v742
        %747 = vst [vmem:[%s177] sm:$0xf] %v743
        %748 = vst [vmem:[%s177 + $0x4] sm:$0xf] %v744
        %749 = vst [vmem:[%s177 + $0x8] sm:$0xf] %v745
        %750 = vst [vmem:[%s177 + $0xc] sm:$0xf] %v746
        %s751 = sand.u32 %s90, 1
        %s752 = sand.u32 %s90, 1
        %s753 = smul.addr %s752, 16
        %s754 = scalar_lea.vmem [#allocation2], %s753
        // Predicated region
        $region33: #{net_forward.4} parent=31 // pred_check
          %p755 = pneg %p100
        $region34: #{net_forward.4} parent=31 // pred_check_branch
          %757 = sbr.rel (%p755) target = $region36
        $region35: #{net_forward.4} parent=31 // pred_region
          %s758 = smul.u32 4, %s14
          %s759 = ssub.s32 7, %s758
          %p760 = scmp.lt.s32.totalorder %s759, 4
          %s761 = scalar_select %p760, %s759, 4
          %s762 = smul.u32 4, %s761
          %p763 = scmp.ne.s32.totalorder 0, %s762
          %s764 = smul.addr %s758, 4
          %s765 = scalar_lea.vmem %s3, %s764
          // Predicated region
          $region37: #{net_forward.4} parent=35 // pred_check
            %p766 = pneg %p763
          $region38: #{net_forward.4} parent=35 // pred_check_branch
            %768 = sbr.rel (%p766) target = $region40
          $region39: #{net_forward.4} parent=35 // pred_region
            // Predicated region
            $region41: #{net_forward.4} parent=39 // pred_check
              _
            $region42: #{net_forward.4} parent=39 // pred_check_branch
              %770 = sbr.rel target = $region44
            $region43: #{net_forward.4} parent=39 // pred_region
              // Predicated region
              $region63: #{net_forward.4} parent=43 // pred_check
                _
              $region64: #{net_forward.4} parent=43 // pred_check_branch
                %826 = sbr.rel (0) target = $region66
              $region65: #{net_forward.4} parent=43 // pred_region
                %s828 = ssub.s32 16, 1
                %s829 = sshrl.u32 %s761, 2
                // While loop
                $region67: #{net_forward.4} parent=65 // loop_pre_header
                  _
                $region68: #{net_forward.4} parent=65 // loop_header
                  %s831 = sphi 0, %s833
                  %p832 = scmp.ge.s32.totalorder %s831, %s829
                  %s836 = sphi 0, %s849
                  %s837 = sphi %s754, %s852
                  %s838 = sphi %s765, %s853
                $region69: #{net_forward.4} parent=65 // loop_header_branch
                  %835 = sbr.rel (%p832) target = $region73
                $region70: #{net_forward.4} parent=65 // loop_body
                  %v839 = vld [vmem:[%s837] sm:%s828]
                  %840 = vst [vmem:[%s838] sm:%s828] %v839
                  %v841 = vld [vmem:[%s837 + $0x4] sm:%s828]
                  %842 = vst [vmem:[%s838 + $0x4] sm:%s828] %v841
                  %v843 = vld [vmem:[%s837 + $0x8] sm:%s828]
                  %844 = vst [vmem:[%s838 + $0x8] sm:%s828] %v843
                  %v845 = vld [vmem:[%s837 + $0xc] sm:%s828]
                  %846 = vst [vmem:[%s838 + $0xc] sm:%s828] %v845
                  %s847 = sadd.s32 1, %s836
                  %p848 = scmp.ge.s32.totalorder %s847, %s829
                  %s849 = scalar_select %p848, 0, %s847
                  %s850 = smul.u32 %s849, 16
                  %s851 = smul.u32 %s849, 16
                  %s852 = scalar_lea.vmem %s754, %s850 [#allocation2]
                  %s853 = scalar_lea.vmem %s765, %s851
                $region71: #{net_forward.4} parent=65 // loop_footer
                  %s833 = sadd.s32 %s831, 1
                $region72: #{net_forward.4} parent=65 // loop_footer_branch
                  %830 = sbr.rel target = $region68
                $region73: #{net_forward.4} parent=65 // loop_exit
                  _
                %s854 = sshrl.u32 %s761, 2
                %s855 = sand.u32 %s761, 3
                %s856 = smul.u32 %s854, 4
                %s857 = smul.u32 4, %s856
                %s858 = scalar_lea.vmem %s754, %s857 [#allocation2]
                %s859 = smul.u32 4, %s856
                %s860 = scalar_lea.vmem %s765, %s859
                // While loop
                $region74: #{net_forward.4} parent=65 // loop_pre_header
                  _
                $region75: #{net_forward.4} parent=65 // loop_header
                  %s862 = sphi 0, %s864
                  %p863 = scmp.ge.s32.totalorder %s862, %s855
                  %s867 = sphi 0, %s874
                  %s868 = sphi %s858, %s877
                  %s869 = sphi %s860, %s878
                $region76: #{net_forward.4} parent=65 // loop_header_branch
                  %866 = sbr.rel (%p863) target = $region80
                $region77: #{net_forward.4} parent=65 // loop_body
                  %v870 = vld [vmem:[%s868] sm:%s828]
                  %871 = vst [vmem:[%s869] sm:%s828] %v870
                  %s872 = sadd.s32 1, %s867
                  %p873 = scmp.ge.s32.totalorder %s872, %s855
                  %s874 = scalar_select %p873, 0, %s872
                  %s875 = smul.u32 %s874, 4
                  %s876 = smul.u32 %s874, 4
                  %s877 = scalar_lea.vmem %s858, %s875 [#allocation2]
                  %s878 = scalar_lea.vmem %s860, %s876
                $region78: #{net_forward.4} parent=65 // loop_footer
                  %s864 = sadd.s32 %s862, 1
                $region79: #{net_forward.4} parent=65 // loop_footer_branch
                  %861 = sbr.rel target = $region75
                $region80: #{net_forward.4} parent=65 // loop_exit
                  _
              $region66: #{net_forward.4} parent=43 // pred_fallthru
                _
            $region44: #{net_forward.4} parent=39 // pred_fallthru
              _
            // Predicated region
            $region45: #{net_forward.4} parent=39 // pred_check
              _
            $region46: #{net_forward.4} parent=39 // pred_check_branch
              %772 = sbr.rel (0) target = $region48
            $region47: #{net_forward.4} parent=39 // pred_region
              %s774 = ssub.s32 16, 1
              %s775 = sshrl.u32 %s761, 2
              // While loop
              $region49: #{net_forward.4} parent=47 // loop_pre_header
                _
              $region50: #{net_forward.4} parent=47 // loop_header
                %s777 = sphi 0, %s779
                %p778 = scmp.ge.s32.totalorder %s777, %s775
                %s782 = sphi 0, %s795
                %s783 = sphi %s754, %s798
                %s784 = sphi %s765, %s799
              $region51: #{net_forward.4} parent=47 // loop_header_branch
                %781 = sbr.rel (%p778) target = $region55
              $region52: #{net_forward.4} parent=47 // loop_body
                %v785 = vld [vmem:[%s783] sm:%s774]
                %786 = vst [vmem:[%s784] sm:%s774] %v785
                %v787 = vld [vmem:[%s783 + $0x4] sm:%s774]
                %788 = vst [vmem:[%s784 + $0x4] sm:%s774] %v787
                %v789 = vld [vmem:[%s783 + $0x8] sm:%s774]
                %790 = vst [vmem:[%s784 + $0x8] sm:%s774] %v789
                %v791 = vld [vmem:[%s783 + $0xc] sm:%s774]
                %792 = vst [vmem:[%s784 + $0xc] sm:%s774] %v791
                %s793 = sadd.s32 1, %s782
                %p794 = scmp.ge.s32.totalorder %s793, %s775
                %s795 = scalar_select %p794, 0, %s793
                %s796 = smul.u32 %s795, 16
                %s797 = smul.u32 %s795, 16
                %s798 = scalar_lea.vmem %s754, %s796 [#allocation2]
                %s799 = scalar_lea.vmem %s765, %s797
              $region53: #{net_forward.4} parent=47 // loop_footer
                %s779 = sadd.s32 %s777, 1
              $region54: #{net_forward.4} parent=47 // loop_footer_branch
                %776 = sbr.rel target = $region50
              $region55: #{net_forward.4} parent=47 // loop_exit
                _
              %s800 = sshrl.u32 %s761, 2
              %s801 = sand.u32 %s761, 3
              %s802 = smul.u32 %s800, 4
              %s803 = smul.u32 4, %s802
              %s804 = scalar_lea.vmem %s754, %s803 [#allocation2]
              %s805 = smul.u32 4, %s802
              %s806 = scalar_lea.vmem %s765, %s805
              // While loop
              $region56: #{net_forward.4} parent=47 // loop_pre_header
                _
              $region57: #{net_forward.4} parent=47 // loop_header
                %s808 = sphi 0, %s810
                %p809 = scmp.ge.s32.totalorder %s808, %s801
                %s813 = sphi 0, %s820
                %s814 = sphi %s804, %s823
                %s815 = sphi %s806, %s824
              $region58: #{net_forward.4} parent=47 // loop_header_branch
                %812 = sbr.rel (%p809) target = $region62
              $region59: #{net_forward.4} parent=47 // loop_body
                %v816 = vld [vmem:[%s814] sm:%s774]
                %817 = vst [vmem:[%s815] sm:%s774] %v816
                %s818 = sadd.s32 1, %s813
                %p819 = scmp.ge.s32.totalorder %s818, %s801
                %s820 = scalar_select %p819, 0, %s818
                %s821 = smul.u32 %s820, 4
                %s822 = smul.u32 %s820, 4
                %s823 = scalar_lea.vmem %s804, %s821 [#allocation2]
                %s824 = scalar_lea.vmem %s806, %s822
              $region60: #{net_forward.4} parent=47 // loop_footer
                %s810 = sadd.s32 %s808, 1
              $region61: #{net_forward.4} parent=47 // loop_footer_branch
                %807 = sbr.rel target = $region57
              $region62: #{net_forward.4} parent=47 // loop_exit
                _
            $region48: #{net_forward.4} parent=39 // pred_fallthru
              _
          $region40: #{net_forward.4} parent=35 // pred_fallthru
            _
          %879 = vnop
        $region36: #{net_forward.4} parent=31 // pred_fallthru
          _
      $region32: #{net_forward.4} parent=5 // pred_fallthru
        _
      %p880 = scmp.le.s32.totalorder 2, %s9
      // Predicated region
      $region81: #{net_forward.4} parent=5 // pred_check
        %p881 = pneg %p880
      $region82: #{net_forward.4} parent=5 // pred_check_branch
        %883 = sbr.rel (%p881) target = $region84
      $region83: #{net_forward.4} parent=5 // pred_region
        %s884 = ssub.s32 %s9, 2
        // Predicated region
        $region85: #{net_forward.4} parent=83 // pred_check
          %p885 = pneg %p106
        $region86: #{net_forward.4} parent=83 // pred_check_branch
          %887 = sbr.rel (%p885) target = $region88
        $region87: #{net_forward.4} parent=83 // pred_region
          %s888 = sand.u32 %s91, 1
          %s889 = sand.u32 %s91, 1
          %s890 = smul.addr %s889, 16
          %s891 = scalar_lea.vmem [#allocation2], %s890
        $region88: #{net_forward.4} parent=83 // pred_fallthru
          _
      $region84: #{net_forward.4} parent=5 // pred_fallthru
        _
    $region6: #{net_forward.4} parent=1 // loop_footer
      %s13 = sadd.s32 1, %s9
    $region7: #{net_forward.4} parent=1 // loop_footer_branch
      %8 = sbr.rel target = $region3
    $region8: #{net_forward.4} parent=1 // loop_exit
      _

// kernel: net_forward.5
$region0: #{net_forward.5}
  #allocation0 [shape = 'u32[]', space=smem, size = 0x4, offset = 0x4, fixed_abs, tag = 'smem constant byte address 0x4 - core index']
  #allocation1 [shape = 'u32[72,128]{1,0:T(1,128)}', space=vmem, size = 0x9000, scoped, tag = 'internal scratch']
  %s0 = inlined_call_operand.vmem [shape: bf16[2,400], index: 0, kind: input, shape index: {}]
  %s1 = inlined_call_operand.vmem [shape: bf16[400,128], index: 1, kind: input, shape index: {}]
  %s2 = inlined_call_operand.vmem [shape: f32[1,128], index: 2, kind: input, shape index: {}]
  %s3 = inlined_call_operand.vmem [shape: bf16[128,128], index: 3, kind: input, shape index: {}]
  %s4 = inlined_call_operand.vmem [shape: f32[1,128], index: 4, kind: input, shape index: {}]
  %s5 = inlined_call_operand.vmem [shape: bf16[128,128], index: 5, kind: input, shape index: {}]
  %s6 = inlined_call_operand.vmem [shape: f32[1,128], index: 6, kind: input, shape index: {}]
  %s7 = inlined_call_operand.hbm [shape: f32[2,128], index: 7, kind: output, shape index: {}]
  %s8 = sld [smem:[#allocation0]]
  $region38: #{net_forward.5} parent=0
    _
  %s10 = ssub.s32 1, %s8
  %s11 = scalar_select 0, %s10, %s8
  $region1: #{net_forward.5} parent=0
    #allocation2 [shape = 'u8[1024]{0}', space=vmem, size = 0x400, scoped, tag = 'output window, operand 0, single buffered']
    #allocation3 [shape = 's32[1]{0}', space=sflag, size = 0x4, scoped, tag = 'scoped memory for net_forward.5']
    %12 = vsyncpa [#allocation3], 0
    // Predicated region
    $region2: #{net_forward.5} parent=1 // pred_check
      _
    $region3: #{net_forward.5} parent=1 // pred_check_branch
      %14 = sbr.rel (0) target = $region5
    $region4: #{net_forward.5} parent=1 // pred_region
      _
    $region5: #{net_forward.5} parent=1 // pred_fallthru
      _
    // Predicated region
    $region6: #{net_forward.5} parent=1 // pred_check
      _
    $region7: #{net_forward.5} parent=1 // pred_check_branch
      %16 = sbr.rel (0) target = $region9
    $region8: #{net_forward.5} parent=1 // pred_region
      _
    $region9: #{net_forward.5} parent=1 // pred_fallthru
      _
    // Predicated region
    $region10: #{net_forward.5} parent=1 // pred_check
      _
    $region11: #{net_forward.5} parent=1 // pred_check_branch
      %18 = sbr.rel (0) target = $region13
    $region12: #{net_forward.5} parent=1 // pred_region
      _
    $region13: #{net_forward.5} parent=1 // pred_fallthru
      _
    // Predicated region
    $region14: #{net_forward.5} parent=1 // pred_check
      _
    $region15: #{net_forward.5} parent=1 // pred_check_branch
      %20 = sbr.rel (0) target = $region17
    $region16: #{net_forward.5} parent=1 // pred_region
      _
    $region17: #{net_forward.5} parent=1 // pred_fallthru
      _
    // Predicated region
    $region18: #{net_forward.5} parent=1 // pred_check
      _
    $region19: #{net_forward.5} parent=1 // pred_check_branch
      %22 = sbr.rel (0) target = $region21
    $region20: #{net_forward.5} parent=1 // pred_region
      _
    $region21: #{net_forward.5} parent=1 // pred_fallthru
      _
    // Predicated region
    $region22: #{net_forward.5} parent=1 // pred_check
      _
    $region23: #{net_forward.5} parent=1 // pred_check_branch
      %24 = sbr.rel (0) target = $region25
    $region24: #{net_forward.5} parent=1 // pred_region
      _
    $region25: #{net_forward.5} parent=1 // pred_fallthru
      _
    // Predicated region
    $region26: #{net_forward.5} parent=1 // pred_check
      _
    $region27: #{net_forward.5} parent=1 // pred_check_branch
      %26 = sbr.rel (0) target = $region29
    $region28: #{net_forward.5} parent=1 // pred_region
      _
    $region29: #{net_forward.5} parent=1 // pred_fallthru
      _
    %v28 = vld [vmem:[%s0] sm:$0xf]
    %v29 = vld [vmem:[%s1] sm:$0xf]
    %v30 = vld [vmem:[%s1 + $0x4] sm:$0xf]
    %v31 = vld [vmem:[%s1 + $0x8] sm:$0xf]
    %v32 = vld [vmem:[%s1 + $0xc] sm:$0xf]
    %v33 = vld [vmem:[%s1 + $0x10] sm:$0xf]
    %v34 = vld [vmem:[%s1 + $0x14] sm:$0xf]
    %v35 = vld [vmem:[%s1 + $0x18] sm:$0xf]
    %v36 = vld [vmem:[%s1 + $0x1c] sm:$0xf]
    %v37 = vld [vmem:[%s1 + $0x20] sm:$0xf]
    %v38 = vld [vmem:[%s1 + $0x24] sm:$0xf]
    %v39 = vld [vmem:[%s1 + $0x28] sm:$0xf]
    %v40 = vld [vmem:[%s1 + $0x2c] sm:$0xf]
    %v41 = vld [vmem:[%s1 + $0x30] sm:$0xf]
    %v42 = vld [vmem:[%s1 + $0x34] sm:$0xf]
    %v43 = vld [vmem:[%s1 + $0x38] sm:$0xf]
    %v44 = vld [vmem:[%s1 + $0x3c] sm:$0xf]
    %v45 = vld [vmem:[%s1 + $0x40] sm:$0xf]
    %v46 = vld [vmem:[%s1 + $0x44] sm:$0xf]
    %v47 = vld [vmem:[%s1 + $0x48] sm:$0xf]
    %v48 = vld [vmem:[%s1 + $0x4c] sm:$0xf]
    %v49 = vld [vmem:[%s1 + $0x50] sm:$0xf]
    %v50 = vld [vmem:[%s1 + $0x54] sm:$0xf]
    %v51 = vld [vmem:[%s1 + $0x58] sm:$0xf]
    %v52 = vld [vmem:[%s1 + $0x5c] sm:$0xf]
    %v53 = vld [vmem:[%s1 + $0x60] sm:$0xf]
    %v54 = vld [vmem:[%s1 + $0x64] sm:$0xf]
    %v55 = vld [vmem:[%s1 + $0x68] sm:$0xf]
    %v56 = vld [vmem:[%s1 + $0x6c] sm:$0xf]
    %v57 = vld [vmem:[%s1 + $0x70] sm:$0xf]
    %v58 = vld [vmem:[%s1 + $0x74] sm:$0xf]
    %v59 = vld [vmem:[%s1 + $0x78] sm:$0xf]
    %v60 = vld [vmem:[%s1 + $0x7c] sm:$0xf]
    %v61 = vld [vmem:[%s1 + $0x80] sm:$0xf]
    %v62 = vld [vmem:[%s1 + $0x84] sm:$0xf]
    %v63 = vld [vmem:[%s1 + $0x88] sm:$0xf]
    %v64 = vld [vmem:[%s1 + $0x8c] sm:$0xf]
    %v65 = vld [vmem:[%s1 + $0x90] sm:$0xf]
    %v66 = vld [vmem:[%s1 + $0x94] sm:$0xf]
    %v67 = vld [vmem:[%s1 + $0x98] sm:$0xf]
    %v68 = vld [vmem:[%s1 + $0x9c] sm:$0xf]
    %v69 = vld [vmem:[%s1 + $0xa0] sm:$0xf]
    %v70 = vld [vmem:[%s1 + $0xa4] sm:$0xf]
    %v71 = vld [vmem:[%s1 + $0xa8] sm:$0xf]
    %v72 = vld [vmem:[%s1 + $0xac] sm:$0xf]
    %v73 = vld [vmem:[%s1 + $0xb0] sm:$0xf]
    %v74 = vld [vmem:[%s1 + $0xb4] sm:$0xf]
    %v75 = vld [vmem:[%s1 + $0xb8] sm:$0xf]
    %v76 = vld [vmem:[%s1 + $0xbc] sm:$0xf]
    %v77 = vld [vmem:[%s1 + $0xc0] sm:$0xf]
    %v78 = vld [vmem:[%s1 + $0xc4] sm:$0xf]
    %v79 = vld [vmem:[%s2] sm:$0x1]
    %v81 = vperm.slane %v79, 0
    %84 = vst [vmem:[#allocation1] ss:$9 sm:$0xff] %v28
    %v85 = vld [vmem:[#allocation1] sm:$0xff]
    %v86 = vld [vmem:[#allocation1 + $0x9] sm:$0xff]
    %v87 = vld [vmem:[#allocation1 + $0x12] sm:$0xff]
    %v88 = vld [vmem:[#allocation1 + $0x1b] sm:$0xff]
    %v142 = vunpack.c.l.b16 %v29
    %v143 = vunpack.c.l.b16 %v30
    %v144 = vunpack.c.l.b16 %v31
    %v145 = vunpack.c.l.b16 %v32
    %v146 = vunpack.c.l.b16 %v33
    %v147 = vunpack.c.l.b16 %v34
    %v148 = vunpack.c.l.b16 %v35
    %v149 = vunpack.c.l.b16 %v36
    %v150 = vunpack.c.l.b16 %v37
    %v151 = vunpack.c.l.b16 %v38
    %v152 = vunpack.c.l.b16 %v39
    %v153 = vunpack.c.l.b16 %v40
    %v154 = vunpack.c.l.b16 %v41
    %v155 = vunpack.c.l.b16 %v42
    %v156 = vunpack.c.l.b16 %v43
    %v157 = vunpack.c.l.b16 %v44
    %v158 = vunpack.c.l.b16 %v45
    %v159 = vunpack.c.l.b16 %v46
    %v160 = vunpack.c.l.b16 %v47
    %v161 = vunpack.c.l.b16 %v48
    %v162 = vunpack.c.l.b16 %v49
    %v163 = vunpack.c.l.b16 %v50
    %v164 = vunpack.c.l.b16 %v51
    %v165 = vunpack.c.l.b16 %v52
    %v166 = vunpack.c.l.b16 %v53
    %v167 = vunpack.c.l.b16 %v54
    %v168 = vunpack.c.l.b16 %v55
    %v169 = vunpack.c.l.b16 %v56
    %v170 = vunpack.c.l.b16 %v57
    %v171 = vunpack.c.l.b16 %v58
    %v172 = vunpack.c.l.b16 %v59
    %v173 = vunpack.c.l.b16 %v60
    %v174 = vunpack.c.l.b16 %v61
    %v175 = vunpack.c.l.b16 %v62
    %v176 = vunpack.c.l.b16 %v63
    %v177 = vunpack.c.l.b16 %v64
    %v178 = vunpack.c.l.b16 %v65
    %v179 = vunpack.c.l.b16 %v66
    %v180 = vunpack.c.l.b16 %v67
    %v181 = vunpack.c.l.b16 %v68
    %v182 = vunpack.c.l.b16 %v69
    %v183 = vunpack.c.l.b16 %v70
    %v184 = vunpack.c.l.b16 %v71
    %v185 = vunpack.c.l.b16 %v72
    %v186 = vunpack.c.l.b16 %v73
    %v187 = vunpack.c.l.b16 %v74
    %v188 = vunpack.c.l.b16 %v75
    %v189 = vunpack.c.l.b16 %v76
    %v190 = vunpack.c.l.b16 %v77
    %v191 = vunpack.c.l.b16 %v78
    %v192 = vpack.c.b16 %v143, %v142
    %v193 = vpack.c.b16 %v145, %v144
    %v194 = vpack.c.b16 %v147, %v146
    %v195 = vpack.c.b16 %v149, %v148
    %v196 = vpack.c.b16 %v151, %v150
    %v197 = vpack.c.b16 %v153, %v152
    %v198 = vpack.c.b16 %v155, %v154
    %v199 = vpack.c.b16 %v157, %v156
    %v200 = vpack.c.b16 %v159, %v158
    %v201 = vpack.c.b16 %v161, %v160
    %v202 = vpack.c.b16 %v163, %v162
    %v203 = vpack.c.b16 %v165, %v164
    %v204 = vpack.c.b16 %v167, %v166
    %v205 = vpack.c.b16 %v169, %v168
    %v206 = vpack.c.b16 %v171, %v170
    %v207 = vpack.c.b16 %v173, %v172
    %v208 = vpack.c.b16 %v175, %v174
    %v209 = vpack.c.b16 %v177, %v176
    %v210 = vpack.c.b16 %v179, %v178
    %v211 = vpack.c.b16 %v181, %v180
    %v212 = vpack.c.b16 %v183, %v182
    %v213 = vpack.c.b16 %v185, %v184
    %v214 = vpack.c.b16 %v187, %v186
    %v215 = vpack.c.b16 %v189, %v188
    %v216 = vpack.c.b16 %v191, %v190
    %vm242 = vcmask 130048
    %v243 = vsel %vm242, %v88, 0
    %245 = vmatpush.bf16.msra.mxu0 %v199
    %246 = vmatpush.bf16.msra.mxu0 %v198
    %247 = vmatpush.bf16.msra.mxu0 %v197
    %248 = vmatpush.bf16.msra.mxu0 %v196
    %249 = vmatpush.bf16.msra.mxu0 %v195
    %250 = vmatpush.bf16.msra.mxu0 %v194
    %251 = vmatpush.bf16.msra.mxu0 %v193
    %252 = vmatpush.bf16.msra.mxu0 %v192
    %253 = vmatmul.bf16.gmra.mxu0 %v85
    %v254 = vpop.f32.mrf.mxu0
    %v255 = vadd.f32 %v81, %v254
    %v256 = vpop.f32.mrf.mxu0
    %257 = vdwg.mxu0
    %258 = vmatpush.bf16.msra.mxu0 %v207
    %259 = vmatpush.bf16.msra.mxu0 %v206
    %260 = vmatpush.bf16.msra.mxu0 %v205
    %261 = vmatpush.bf16.msra.mxu0 %v204
    %262 = vmatpush.bf16.msra.mxu0 %v203
    %263 = vmatpush.bf16.msra.mxu0 %v202
    %264 = vmatpush.bf16.msra.mxu0 %v201
    %265 = vmatpush.bf16.msra.mxu0 %v200
    %266 = vmatmul.bf16.gmra.mxu0 %v86
    %v267 = vpop.f32.mrf.mxu0
    %v268 = vadd.f32 %v255, %v267
    %v269 = vpop.f32.mrf.mxu0
    %270 = vdwg.mxu0
    %271 = vmatpush.bf16.msra.mxu0 %v215
    %272 = vmatpush.bf16.msra.mxu0 %v214
    %273 = vmatpush.bf16.msra.mxu0 %v213
    %274 = vmatpush.bf16.msra.mxu0 %v212
    %275 = vmatpush.bf16.msra.mxu0 %v211
    %276 = vmatpush.bf16.msra.mxu0 %v210
    %277 = vmatpush.bf16.msra.mxu0 %v209
    %278 = vmatpush.bf16.msra.mxu0 %v208
    %279 = vmatmul.bf16.gmra.mxu0 %v87
    %v280 = vpop.f32.mrf.mxu0
    %v281 = vadd.f32 %v268, %v280
    %v282 = vpop.f32.mrf.mxu0
    %283 = vdwg.mxu0
    %284 = vmatpush.bf16.msra.mxu0 0
    %285 = vmatpush.bf16.msra.mxu0 0
    %286 = vmatpush.bf16.msra.mxu0 0
    %287 = vmatpush.bf16.msra.mxu0 0
    %288 = vmatpush.bf16.msra.mxu0 0
    %289 = vmatpush.bf16.msra.mxu0 0
    %290 = vmatpush.bf16.msra.mxu0 0
    %291 = vmatpush.bf16.msra.mxu0 %v216
    %292 = vmatmul.bf16.gmra.mxu0 %v243
    %v293 = vpop.f32.mrf.mxu0
    %v294 = vadd.f32 %v281, %v293
    %v295 = vpop.f32.mrf.mxu0
    %296 = vdwg.mxu0
    %v297 = vmax.f32 %v294, 0.0
    %v298 = vpack.c.bf16 %v297, %v297
    %v299 = vld [vmem:[%s3] sm:$0xf]
    %v300 = vld [vmem:[%s3 + $0x4] sm:$0xf]
    %v301 = vld [vmem:[%s3 + $0x8] sm:$0xf]
    %v302 = vld [vmem:[%s3 + $0xc] sm:$0xf]
    %v303 = vld [vmem:[%s3 + $0x10] sm:$0xf]
    %v304 = vld [vmem:[%s3 + $0x14] sm:$0xf]
    %v305 = vld [vmem:[%s3 + $0x18] sm:$0xf]
    %v306 = vld [vmem:[%s3 + $0x1c] sm:$0xf]
    %v307 = vld [vmem:[%s3 + $0x20] sm:$0xf]
    %v308 = vld [vmem:[%s3 + $0x24] sm:$0xf]
    %v309 = vld [vmem:[%s3 + $0x28] sm:$0xf]
    %v310 = vld [vmem:[%s3 + $0x2c] sm:$0xf]
    %v311 = vld [vmem:[%s3 + $0x30] sm:$0xf]
    %v312 = vld [vmem:[%s3 + $0x34] sm:$0xf]
    %v313 = vld [vmem:[%s3 + $0x38] sm:$0xf]
    %v314 = vld [vmem:[%s3 + $0x3c] sm:$0xf]
    %v315 = vld [vmem:[%s4] sm:$0x1]
    %v317 = vperm.slane %v315, 0
    %v335 = vunpack.c.l.b16 %v299
    %v336 = vunpack.c.l.b16 %v300
    %v337 = vunpack.c.l.b16 %v301
    %v338 = vunpack.c.l.b16 %v302
    %v339 = vunpack.c.l.b16 %v303
    %v340 = vunpack.c.l.b16 %v304
    %v341 = vunpack.c.l.b16 %v305
    %v342 = vunpack.c.l.b16 %v306
    %v343 = vunpack.c.l.b16 %v307
    %v344 = vunpack.c.l.b16 %v308
    %v345 = vunpack.c.l.b16 %v309
    %v346 = vunpack.c.l.b16 %v310
    %v347 = vunpack.c.l.b16 %v311
    %v348 = vunpack.c.l.b16 %v312
    %v349 = vunpack.c.l.b16 %v313
    %v350 = vunpack.c.l.b16 %v314
    %v351 = vpack.c.b16 %v336, %v335
    %v352 = vpack.c.b16 %v338, %v337
    %v353 = vpack.c.b16 %v340, %v339
    %v354 = vpack.c.b16 %v342, %v341
    %v355 = vpack.c.b16 %v344, %v343
    %v356 = vpack.c.b16 %v346, %v345
    %v357 = vpack.c.b16 %v348, %v347
    %v358 = vpack.c.b16 %v350, %v349
    %367 = vmatpush.bf16.msra.mxu0 %v358
    %368 = vmatpush.bf16.msra.mxu0 %v357
    %369 = vmatpush.bf16.msra.mxu0 %v356
    %370 = vmatpush.bf16.msra.mxu0 %v355
    %371 = vmatpush.bf16.msra.mxu0 %v354
    %372 = vmatpush.bf16.msra.mxu0 %v353
    %373 = vmatpush.bf16.msra.mxu0 %v352
    %374 = vmatpush.bf16.msra.mxu0 %v351
    %375 = vmatmul.bf16.gmra.mxu0 %v298
    %v376 = vpop.f32.mrf.mxu0
    %v377 = vadd.f32 %v317, %v376
    %v378 = vpop.f32.mrf.mxu0
    %379 = vdwg.mxu0
    %v380 = vmax.f32 %v377, 0.0
    %v381 = vpack.c.bf16 %v380, %v380
    %v382 = vld [vmem:[%s5] sm:$0xf]
    %v383 = vld [vmem:[%s5 + $0x4] sm:$0xf]
    %v384 = vld [vmem:[%s5 + $0x8] sm:$0xf]
    %v385 = vld [vmem:[%s5 + $0xc] sm:$0xf]
    %v386 = vld [vmem:[%s5 + $0x10] sm:$0xf]
    %v387 = vld [vmem:[%s5 + $0x14] sm:$0xf]
    %v388 = vld [vmem:[%s5 + $0x18] sm:$0xf]
    %v389 = vld [vmem:[%s5 + $0x1c] sm:$0xf]
    %v390 = vld [vmem:[%s5 + $0x20] sm:$0xf]
    %v391 = vld [vmem:[%s5 + $0x24] sm:$0xf]
    %v392 = vld [vmem:[%s5 + $0x28] sm:$0xf]
    %v393 = vld [vmem:[%s5 + $0x2c] sm:$0xf]
    %v394 = vld [vmem:[%s5 + $0x30] sm:$0xf]
    %v395 = vld [vmem:[%s5 + $0x34] sm:$0xf]
    %v396 = vld [vmem:[%s5 + $0x38] sm:$0xf]
    %v397 = vld [vmem:[%s5 + $0x3c] sm:$0xf]
    %v398 = vld [vmem:[%s6] sm:$0x1]
    %v400 = vperm.slane %v398, 0
    %v418 = vunpack.c.l.b16 %v382
    %v419 = vunpack.c.l.b16 %v383
    %v420 = vunpack.c.l.b16 %v384
    %v421 = vunpack.c.l.b16 %v385
    %v422 = vunpack.c.l.b16 %v386
    %v423 = vunpack.c.l.b16 %v387
    %v424 = vunpack.c.l.b16 %v388
    %v425 = vunpack.c.l.b16 %v389
    %v426 = vunpack.c.l.b16 %v390
    %v427 = vunpack.c.l.b16 %v391
    %v428 = vunpack.c.l.b16 %v392
    %v429 = vunpack.c.l.b16 %v393
    %v430 = vunpack.c.l.b16 %v394
    %v431 = vunpack.c.l.b16 %v395
    %v432 = vunpack.c.l.b16 %v396
    %v433 = vunpack.c.l.b16 %v397
    %v434 = vpack.c.b16 %v419, %v418
    %v435 = vpack.c.b16 %v421, %v420
    %v436 = vpack.c.b16 %v423, %v422
    %v437 = vpack.c.b16 %v425, %v424
    %v438 = vpack.c.b16 %v427, %v426
    %v439 = vpack.c.b16 %v429, %v428
    %v440 = vpack.c.b16 %v431, %v430
    %v441 = vpack.c.b16 %v433, %v432
    %450 = vmatpush.bf16.msra.mxu0 %v441
    %451 = vmatpush.bf16.msra.mxu0 %v440
    %452 = vmatpush.bf16.msra.mxu0 %v439
    %453 = vmatpush.bf16.msra.mxu0 %v438
    %454 = vmatpush.bf16.msra.mxu0 %v437
    %455 = vmatpush.bf16.msra.mxu0 %v436
    %456 = vmatpush.bf16.msra.mxu0 %v435
    %457 = vmatpush.bf16.msra.mxu0 %v434
    %458 = vmatmul.bf16.gmra.mxu0 %v381
    %v459 = vpop.f32.mrf.mxu0
    %v460 = vadd.f32 %v400, %v459
    %v461 = vpop.f32.mrf.mxu0
    %462 = vdwg.mxu0
    %463 = vst [vmem:[#allocation2] sm:$0x3] %v460
    // Predicated region
    $region30: #{net_forward.5} parent=1 // pred_check
      _
    $region31: #{net_forward.5} parent=1 // pred_check_branch
      %465 = sbr.rel (0) target = $region33
    $region32: #{net_forward.5} parent=1 // pred_region
      %467 = vsyncadd [#allocation3], 0
      %s469 = sshll.u32 [#allocation2], 4
      %s470 = int_to_ptr.vmem [resolvable:$true] %s469
      %s471 = sshll.u32 %s7, 4
      %s472 = int_to_ptr.hbm [resolvable:$true] %s471
      %474 = dma.vmem_to_hbm [thread:$0]  %s470, 32, %s472, [#allocation3]
    $region33: #{net_forward.5} parent=1 // pred_fallthru
      _
    // Predicated region
    $region34: #{net_forward.5} parent=1 // pred_check
      _
    $region35: #{net_forward.5} parent=1 // pred_check_branch
      %476 = sbr.rel (0) target = $region37
    $region36: #{net_forward.5} parent=1 // pred_region
      %478 = dma.done [#allocation3], 32
    $region37: #{net_forward.5} parent=1 // pred_fallthru
      _
    %479 = vsyncpa [#allocation3], 1

</llo_original>
